<compile_context>
chip_gen: v6e
topology: v6e:2x2x1
jax: 0.10.0
libtpu: 0.0.40
codegen_flags: <defaults>
</compile_context>

<pallas_src>
import functools

import jax
import jax.numpy as jnp
from jax.experimental import pallas as pl
from jax.experimental.pallas import tpu as pltpu


# ----------------------------- Pallas kernel -------------------------------

def fused_flat_classify_kernel(p_ref, wc_ref, bc_ref, wh_ref, bh_ref, o_ref,
                               *, group, hw, inv_hw):
    """Fused forward for `group` images per grid step.

    p_ref : (G*HW, Kp)  bf16  im2col patches of G images
    wc_ref: (Kp, Cfp)   bf16  conv weight as GEMM matrix (grid-invariant)
    bc_ref: (1, Cfp)    f32   conv bias row (zero-padded)
    wh_ref: (Cfp, Np)   bf16  all linear heads fused column-wise (zero-padded)
    bh_ref: (1, Np)     f32   fused head biases (zero-padded)
    o_ref : (G, Np)     f32   fused logits block (>=8 sublanes, 128 lanes)
    """
    # conv-as-GEMM on the MXU: bf16 x bf16 -> f32 accumulation, M = G*HW rows
    # streamed behind the resident weight tile.
    h = jnp.dot(p_ref[...], wc_ref[...], preferred_element_type=jnp.float32)
    # bias + ReLU epilogue on the VPU (f32).
    h = jnp.maximum(h + bc_ref[...], 0.0)                        # (G*HW, Cfp)
    # Global average pool per image.  HW is a multiple of 8, so this reshape is
    # layout-preserving; the reduce is a sublane sum, scaled by 1/HW (no divide).
    cfp = h.shape[-1]
    feat = jnp.sum(h.reshape(group, hw, cfp), axis=1) * inv_hw   # (G, Cfp) f32
    # All heads in one GEMM, fused so `feat` never leaves VMEM.  bf16 operands
    # with explicit f32 accumulation (intentional precision, single MXU pass).
    o_ref[...] = (
        jnp.dot(feat.astype(jnp.bfloat16), wh_ref[...],
                preferred_element_type=jnp.float32)
        + bh_ref[...]
    )


# ------------------------------- glue (JAX) --------------------------------

def _im2col_3x3(x_nhwc, k_pad):
    """3x3, stride 1, pad 1 patch extraction in bf16. Returns (B, H*W, k_pad)."""
    B, H, W, C = x_nhwc.shape
    xb = x_nhwc.astype(jnp.bfloat16)          # cast BEFORE the 9x blow-up
    xp = jnp.pad(xb, ((0, 0), (1, 1), (1, 1), (0, 0)))
    cols = [xp[:, dh:dh + H, dw:dw + W, :] for dh in range(3) for dw in range(3)]
    patches = jnp.concatenate(cols, axis=-1).reshape(B, H * W, 9 * C)
    if k_pad > 9 * C:
        patches = jnp.pad(patches, ((0, 0), (0, 0), (0, k_pad - 9 * C)))
    return patches


def _group_and_steps(batch):
    """Images per grid step and grid length.

    >= 8 images/step for unmasked 8-sublane output stores; <= 32 so the f32
    conv intermediate (G*HW x 128) stays a few MiB (fits v7x's 64 MiB VMEM with
    double-buffered inputs).  Grid length kept even when > 1 so both v7x
    TensorCores get balanced work under dimension_semantics=("parallel",).
    """
    g = max(8, min(32, ((batch + 7) // 8) * 8))
    steps = -(-batch // g)
    if steps > 1 and steps % 2:
        steps += 1
    return g, steps


def init_params(key, c_in=4, feat_dim=32, n_class=(5, 7),
                k_pad=48, cf_pad=128, n_pad=128):
    """Deterministic synthetic parameters.

    Keeps the PyTorch layouts (OIHW conv, (n, F) Linear weights) for the
    reference, and precomputes padded bf16 GEMM views used by the kernel so no
    transpose/reshape/pad of weights happens per forward call.
    """
    keys = jax.random.split(key, 2 + 2 * len(n_class))
    conv_w = 0.1 * jax.random.normal(keys[0], (feat_dim, c_in, 3, 3), jnp.float32)
    conv_b = 0.1 * jax.random.normal(keys[1], (feat_dim,), jnp.float32)
    K = 9 * c_in
    assert K <= k_pad and feat_dim <= cf_pad and sum(n_class) <= n_pad
    assert k_pad % 16 == 0, "keep bf16 sublane packing clean"

    # GEMM view matching the im2col ordering (kh, kw, cin), zero-padded only up
    # to k_pad (48) so the padding is not carried 128-wide through HBM.
    w_mat = jnp.transpose(conv_w, (2, 3, 1, 0)).reshape(K, feat_dim)
    conv_w_mat = jnp.zeros((k_pad, cf_pad), jnp.float32).at[:K, :feat_dim].set(w_mat)
    conv_b_row = jnp.zeros((1, cf_pad), jnp.float32).at[0, :feat_dim].set(conv_b)

    params = {
        "conv_w": conv_w,                                   # (Cout, Cin, 3, 3) f32
        "conv_b": conv_b,                                   # (Cout,) f32
        "conv_w_mat": conv_w_mat.astype(jnp.bfloat16),      # (k_pad, cf_pad) bf16
        "conv_b_row": conv_b_row,                           # (1, cf_pad) f32
    }

    # All heads fused column-wise into one (cf_pad, n_pad) bf16 matrix + f32 bias row.
    head_w = jnp.zeros((cf_pad, n_pad), jnp.float32)
    head_b = jnp.zeros((1, n_pad), jnp.float32)
    off = 0
    for i, n in enumerate(n_class):
        fw = 0.1 * jax.random.normal(keys[2 + 2 * i], (n, feat_dim), jnp.float32)
        fb = 0.1 * jax.random.normal(keys[3 + 2 * i], (n,), jnp.float32)
        params[f"fc_{i}_w"] = fw                            # nn.Linear weight (n, F)
        params[f"fc_{i}_b"] = fb                            # (n,)
        head_w = head_w.at[:feat_dim, off:off + n].set(fw.T)
        head_b = head_b.at[0, off:off + n].set(fb)
        off += n
    params["head_w"] = head_w.astype(jnp.bfloat16)
    params["head_b"] = head_b
    return params


def flat_classify_forward(x_nchw, params, n_class=(5, 7), forward_ptr=(0,)):
    """Mirrors FlatClassify.forward: features = pool(basenet(x)); heads in forward_ptr.

    Single fused pallas_call over a batched grid; the padded 128-wide logits
    slab is sliced per head in the wrapper (heads outside forward_ptr dropped).
    """
    B, C, H, W = x_nchw.shape
    HW = H * W
    assert HW % 8 == 0
    x_nhwc = jnp.transpose(x_nchw, (0, 2, 3, 1))

    Kp, Cfp = params["conv_w_mat"].shape
    Np = params["head_w"].shape[1]

    group, steps = _group_and_steps(B)
    B_pad = steps * group

    patches = _im2col_3x3(x_nhwc, Kp)                       # (B, HW, Kp) bf16
    if B_pad > B:
        patches = jnp.pad(patches, ((0, B_pad - B), (0, 0), (0, 0)))
    patches = patches.reshape(B_pad * HW, Kp)

    kernel = functools.partial(fused_flat_classify_kernel,
                               group=group, hw=HW, inv_hw=1.0 / HW)
    logits_pad = pl.pallas_call(
        kernel,
        out_shape=jax.ShapeDtypeStruct((B_pad, Np), jnp.float32),
        grid=(steps,),
        in_specs=[
            pl.BlockSpec((group * HW, Kp), lambda b: (b, 0)),  # this group's patches
            pl.BlockSpec((Kp, Cfp), lambda b: (0, 0)),         # conv GEMM weight (resident)
            pl.BlockSpec((1, Cfp), lambda b: (0, 0)),          # conv bias row
            pl.BlockSpec((Cfp, Np), lambda b: (0, 0)),         # fused head weight (resident)
            pl.BlockSpec((1, Np), lambda b: (0, 0)),           # fused head bias
        ],
        out_specs=pl.BlockSpec((group, Np), lambda b: (b, 0)),  # (>=8, 128) unmasked store
        compiler_params=pltpu.CompilerParams(
            dimension_semantics=("parallel",)),
    )(patches, params["conv_w_mat"], params["conv_b_row"],
      params["head_w"], params["head_b"])

    logits = logits_pad[:B]

    # Static per-head column offsets inside the fused logits slab.
    offsets = []
    off = 0
    for n in n_class:
        offsets.append(off)
        off += n

    outs = []
    for i, n in enumerate(n_class):
        if i in forward_ptr:
            outs.append(logits[:, offsets[i]:offsets[i] + n])
    return outs


def reference_forward(x_nchw, params, n_class=(5, 7), forward_ptr=(0,)):
    """Plain-JAX reference with PyTorch conv semantics (NCHW / OIHW), all f32."""
    y = jax.lax.conv_general_dilated(
        x_nchw, params["conv_w"], window_strides=(1, 1),
        padding=((1, 1), (1, 1)),
        dimension_numbers=("NCHW", "OIHW", "NCHW"))
    y = jax.nn.relu(y + params["conv_b"].reshape(1, -1, 1, 1))
    feats = jnp.mean(y, axis=(2, 3))
    outs = []
    for i in range(len(n_class)):
        if i in forward_ptr:
            outs.append(feats @ params[f"fc_{i}_w"].T + params[f"fc_{i}_b"])
    return outs


# ---------------------------------- main -----------------------------------

if __name__ == "__main__":
    key = jax.random.PRNGKey(0)
    k_x, k_p = jax.random.split(key)

    B, C, H, W = 2, 4, 16, 16
    n_class = (5, 7)
    forward_ptr = (0, 1)   # select both heads (module default is [0])

    x = jax.random.normal(k_x, (B, C, H, W), jnp.float32)
    params = init_params(k_p, c_in=C, feat_dim=32, n_class=n_class)

    fwd = jax.jit(functools.partial(
        flat_classify_forward, n_class=n_class, forward_ptr=forward_ptr))
    outs = fwd(x, params)
    outs = [jax.block_until_ready(o) for o in outs]

    refs = reference_forward(x, params, n_class=n_class, forward_ptr=forward_ptr)
    for o, r in zip(outs, refs):
        assert o.shape == r.shape, (o.shape, r.shape)
        # bf16 MXU operands vs f32 reference -> slightly looser tolerance.
        assert jnp.allclose(o, r, rtol=2e-2, atol=2e-2), float(jnp.max(jnp.abs(o - r)))

    print("KERNEL_OK")
</pallas_src>

<mosaic_0001>
module attributes {stable_mosaic.version = 11 : i64} {
  func.func @fused_flat_classify_kernel(%arg0: i32, %arg1: memref<2048x48xbf16, #tpu.memory_space<vmem>>, %arg2: memref<48x128xbf16, #tpu.memory_space<vmem>>, %arg3: memref<1x128xf32, #tpu.memory_space<vmem>>, %arg4: memref<128x128xbf16, #tpu.memory_space<vmem>>, %arg5: memref<1x128xf32, #tpu.memory_space<vmem>>, %arg6: memref<8x128xf32, #tpu.memory_space<vmem>>) attributes {dimension_semantics = [#tpu.dimension_semantics<parallel>], iteration_bounds = array<i64: 1>, scalar_prefetch = 0 : i64, scratch_operands = 0 : i64, tpu.core_type = #tpu.core_type<tc>, window_params = [{transform_indices = @transform_0, window_bounds = array<i64: 2048, 48>}, {pipeline_mode = #tpu.pipeline_mode<synchronous>, transform_indices = @transform_1, window_bounds = array<i64: 48, 128>}, {pipeline_mode = #tpu.pipeline_mode<synchronous>, transform_indices = @transform_2, window_bounds = array<i64: 1, 128>}, {pipeline_mode = #tpu.pipeline_mode<synchronous>, transform_indices = @transform_3, window_bounds = array<i64: 128, 128>}, {pipeline_mode = #tpu.pipeline_mode<synchronous>, transform_indices = @transform_4, window_bounds = array<i64: 1, 128>}, {transform_indices = @transform_5, window_bounds = array<i64: 8, 128>}]} {
    %c0 = arith.constant 0 : index
    %c0_0 = arith.constant 0 : index
    %0 = vector.load %arg1[%c0, %c0_0] : memref<2048x48xbf16, #tpu.memory_space<vmem>>, vector<2048x48xbf16>
    %c0_1 = arith.constant 0 : index
    %c0_2 = arith.constant 0 : index
    %1 = vector.load %arg2[%c0_1, %c0_2] : memref<48x128xbf16, #tpu.memory_space<vmem>>, vector<48x128xbf16>
    %cst = arith.constant dense<0.000000e+00> : vector<2048x128xf32>
    %2 = tpu.matmul %0, %1, %cst {dimension_numbers = #tpu.dot_dimension_numbers<[1], [0], [0], [1], [0, 0, 1, 1], [], []>} : vector<2048x48xbf16>, vector<48x128xbf16>, vector<2048x128xf32> -> vector<2048x128xf32>
    %c0_3 = arith.constant 0 : index
    %c0_4 = arith.constant 0 : index
    %3 = vector.load %arg3[%c0_3, %c0_4] : memref<1x128xf32, #tpu.memory_space<vmem>>, vector<1x128xf32>
    %4 = vector.broadcast %3 : vector<1x128xf32> to vector<2048x128xf32>
    %5 = arith.addf %2, %4 : vector<2048x128xf32>
    %cst_5 = arith.constant 0.000000e+00 : f32
    %6 = vector.broadcast %cst_5 : f32 to vector<2048x128xf32>
    %7 = arith.maximumf %5, %6 : vector<2048x128xf32>
    %8 = vector.shape_cast %7 : vector<2048x128xf32> to vector<8x256x128xf32>
    %cst_6 = arith.constant dense<0.000000e+00> : vector<8x128xf32>
    %9 = vector.multi_reduction <add>, %8, %cst_6 [1] : vector<8x256x128xf32> to vector<8x128xf32>
    %cst_7 = arith.constant 3.906250e-03 : f32
    %10 = vector.broadcast %cst_7 : f32 to vector<8x128xf32>
    %11 = arith.mulf %9, %10 : vector<8x128xf32>
    %12 = arith.truncf %11 : vector<8x128xf32> to vector<8x128xbf16>
    %c0_8 = arith.constant 0 : index
    %c0_9 = arith.constant 0 : index
    %13 = vector.load %arg4[%c0_8, %c0_9] : memref<128x128xbf16, #tpu.memory_space<vmem>>, vector<128x128xbf16>
    %cst_10 = arith.constant dense<0.000000e+00> : vector<8x128xf32>
    %14 = tpu.matmul %12, %13, %cst_10 {dimension_numbers = #tpu.dot_dimension_numbers<[1], [0], [0], [1], [0, 0, 1, 1], [], []>} : vector<8x128xbf16>, vector<128x128xbf16>, vector<8x128xf32> -> vector<8x128xf32>
    %c0_11 = arith.constant 0 : index
    %c0_12 = arith.constant 0 : index
    %15 = vector.load %arg5[%c0_11, %c0_12] : memref<1x128xf32, #tpu.memory_space<vmem>>, vector<1x128xf32>
    %16 = vector.broadcast %15 : vector<1x128xf32> to vector<8x128xf32>
    %17 = arith.addf %14, %16 : vector<8x128xf32>
    %c0_13 = arith.constant 0 : index
    %c0_14 = arith.constant 0 : index
    %18 = vector.load %arg6[%c0_13, %c0_14] : memref<8x128xf32, #tpu.memory_space<vmem>>, vector<8x128xf32>
    tpu.vector_store %arg6[%c0_13, %c0_14], %17 {strides = array<i32>} : memref<8x128xf32, #tpu.memory_space<vmem>>, vector<8x128xf32>,
    return
  }
  func.func @transform_0(%arg0: i32) -> (i32, i32) {
    %c0_i32 = arith.constant 0 : i32
    %c0_i32_0 = arith.constant 0 : i32
    return %arg0, %c0_i32 : i32, i32
  }
  func.func @transform_1(%arg0: i32) -> (i32, i32) {
    %c0_i32 = arith.constant 0 : i32
    %c0_i32_0 = arith.constant 0 : i32
    %c0_i32_1 = arith.constant 0 : i32
    return %c0_i32, %c0_i32_0 : i32, i32
  }
  func.func @transform_2(%arg0: i32) -> (i32, i32) {
    %c0_i32 = arith.constant 0 : i32
    %c0_i32_0 = arith.constant 0 : i32
    %c0_i32_1 = arith.constant 0 : i32
    return %c0_i32, %c0_i32_0 : i32, i32
  }
  func.func @transform_3(%arg0: i32) -> (i32, i32) {
    %c0_i32 = arith.constant 0 : i32
    %c0_i32_0 = arith.constant 0 : i32
    %c0_i32_1 = arith.constant 0 : i32
    return %c0_i32, %c0_i32_0 : i32, i32
  }
  func.func @transform_4(%arg0: i32) -> (i32, i32) {
    %c0_i32 = arith.constant 0 : i32
    %c0_i32_0 = arith.constant 0 : i32
    %c0_i32_1 = arith.constant 0 : i32
    return %c0_i32, %c0_i32_0 : i32, i32
  }
  func.func @transform_5(%arg0: i32) -> (i32, i32) {
    %c0_i32 = arith.constant 0 : i32
    %c0_i32_0 = arith.constant 0 : i32
    return %arg0, %c0_i32 : i32, i32
  }
}

</mosaic_0001>

<llo_original>
// kernel: flat_classify_forward.1
$region0: #{flat_classify_forward.1}
  #allocation0 [shape = 'u32[]', space=smem, size = 0x4, offset = 0x4, fixed_abs, tag = 'smem constant byte address 0x4 - core index']
  #allocation1 [shape = 'u32[144,128]{1,0:T(1,128)}', space=vmem, size = 0x12000, scoped, tag = 'internal scratch']
  %s0 = inlined_call_operand.vmem [shape: bf16[2048,48], index: 0, kind: input, shape index: {}]
  %s1 = inlined_call_operand.vmem [shape: bf16[48,128], index: 1, kind: input, shape index: {}]
  %s2 = inlined_call_operand.vmem [shape: f32[1,128], index: 2, kind: input, shape index: {}]
  %s3 = inlined_call_operand.vmem [shape: bf16[128,128], index: 3, kind: input, shape index: {}]
  %s4 = inlined_call_operand.vmem [shape: f32[1,128], index: 4, kind: input, shape index: {}]
  %s5 = inlined_call_operand.vmem [shape: f32[8,128], index: 5, kind: output, shape index: {}]
  %s6 = sld [smem:[#allocation0]]
  $region30: #{flat_classify_forward.1} parent=0
    _
  %s8 = ssub.s32 1, %s6
  %s9 = scalar_select 0, %s8, %s6
  // Predicated region
  $region2: #{flat_classify_forward.1} parent=0 // pred_check
    _
  $region3: #{flat_classify_forward.1} parent=0 // pred_check_branch
    %11 = sbr.rel (0) target = $region5
  $region4: #{flat_classify_forward.1} parent=0 // pred_region
    _
  $region5: #{flat_classify_forward.1} parent=0 // pred_fallthru
    _
  // Predicated region
  $region6: #{flat_classify_forward.1} parent=0 // pred_check
    _
  $region7: #{flat_classify_forward.1} parent=0 // pred_check_branch
    %13 = sbr.rel (0) target = $region9
  $region8: #{flat_classify_forward.1} parent=0 // pred_region
    _
  $region9: #{flat_classify_forward.1} parent=0 // pred_fallthru
    _
  // Predicated region
  $region10: #{flat_classify_forward.1} parent=0 // pred_check
    _
  $region11: #{flat_classify_forward.1} parent=0 // pred_check_branch
    %15 = sbr.rel (0) target = $region13
  $region12: #{flat_classify_forward.1} parent=0 // pred_region
    _
  $region13: #{flat_classify_forward.1} parent=0 // pred_fallthru
    _
  // Predicated region
  $region14: #{flat_classify_forward.1} parent=0 // pred_check
    _
  $region15: #{flat_classify_forward.1} parent=0 // pred_check_branch
    %17 = sbr.rel (0) target = $region17
  $region16: #{flat_classify_forward.1} parent=0 // pred_region
    _
  $region17: #{flat_classify_forward.1} parent=0 // pred_fallthru
    _
  // Predicated region
  $region18: #{flat_classify_forward.1} parent=0 // pred_check
    _
  $region19: #{flat_classify_forward.1} parent=0 // pred_check_branch
    %19 = sbr.rel (0) target = $region21
  $region20: #{flat_classify_forward.1} parent=0 // pred_region
    _
  $region21: #{flat_classify_forward.1} parent=0 // pred_fallthru
    _
  %v21 = vld [vmem:[%s0] sm:$0xf]
  %v22 = vld [vmem:[%s0 + $0x4] sm:$0xf]
  %v23 = vld [vmem:[%s0 + $0x8] sm:$0xf]
  %v24 = vld [vmem:[%s0 + $0xc] sm:$0xf]
  %v25 = vld [vmem:[%s0 + $0x10] sm:$0xf]
  %v26 = vld [vmem:[%s0 + $0x14] sm:$0xf]
  %v27 = vld [vmem:[%s0 + $0x18] sm:$0xf]
  %v28 = vld [vmem:[%s0 + $0x1c] sm:$0xf]
  %v29 = vld [vmem:[%s0 + $0x20] sm:$0xf]
  %v30 = vld [vmem:[%s0 + $0x24] sm:$0xf]
  %v31 = vld [vmem:[%s0 + $0x28] sm:$0xf]
  %v32 = vld [vmem:[%s0 + $0x2c] sm:$0xf]
  %v33 = vld [vmem:[%s0 + $0x30] sm:$0xf]
  %v34 = vld [vmem:[%s0 + $0x34] sm:$0xf]
  %v35 = vld [vmem:[%s0 + $0x38] sm:$0xf]
  %v36 = vld [vmem:[%s0 + $0x3c] sm:$0xf]
  %v37 = vld [vmem:[%s0 + $0x40] sm:$0xf]
  %v38 = vld [vmem:[%s0 + $0x44] sm:$0xf]
  %v39 = vld [vmem:[%s0 + $0x48] sm:$0xf]
  %v40 = vld [vmem:[%s0 + $0x4c] sm:$0xf]
  %v41 = vld [vmem:[%s0 + $0x50] sm:$0xf]
  %v42 = vld [vmem:[%s0 + $0x54] sm:$0xf]
  %v43 = vld [vmem:[%s0 + $0x58] sm:$0xf]
  %v44 = vld [vmem:[%s0 + $0x5c] sm:$0xf]
  %v45 = vld [vmem:[%s0 + $0x60] sm:$0xf]
  %v46 = vld [vmem:[%s0 + $0x64] sm:$0xf]
  %v47 = vld [vmem:[%s0 + $0x68] sm:$0xf]
  %v48 = vld [vmem:[%s0 + $0x6c] sm:$0xf]
  %v49 = vld [vmem:[%s0 + $0x70] sm:$0xf]
  %v50 = vld [vmem:[%s0 + $0x74] sm:$0xf]
  %v51 = vld [vmem:[%s0 + $0x78] sm:$0xf]
  %v52 = vld [vmem:[%s0 + $0x7c] sm:$0xf]
  %v53 = vld [vmem:[%s0 + $0x80] sm:$0xf]
  %v54 = vld [vmem:[%s0 + $0x84] sm:$0xf]
  %v55 = vld [vmem:[%s0 + $0x88] sm:$0xf]
  %v56 = vld [vmem:[%s0 + $0x8c] sm:$0xf]
  %v57 = vld [vmem:[%s0 + $0x90] sm:$0xf]
  %v58 = vld [vmem:[%s0 + $0x94] sm:$0xf]
  %v59 = vld [vmem:[%s0 + $0x98] sm:$0xf]
  %v60 = vld [vmem:[%s0 + $0x9c] sm:$0xf]
  %v61 = vld [vmem:[%s0 + $0xa0] sm:$0xf]
  %v62 = vld [vmem:[%s0 + $0xa4] sm:$0xf]
  %v63 = vld [vmem:[%s0 + $0xa8] sm:$0xf]
  %v64 = vld [vmem:[%s0 + $0xac] sm:$0xf]
  %v65 = vld [vmem:[%s0 + $0xb0] sm:$0xf]
  %v66 = vld [vmem:[%s0 + $0xb4] sm:$0xf]
  %v67 = vld [vmem:[%s0 + $0xb8] sm:$0xf]
  %v68 = vld [vmem:[%s0 + $0xbc] sm:$0xf]
  %v69 = vld [vmem:[%s0 + $0xc0] sm:$0xf]
  %v70 = vld [vmem:[%s0 + $0xc4] sm:$0xf]
  %v71 = vld [vmem:[%s0 + $0xc8] sm:$0xf]
  %v72 = vld [vmem:[%s0 + $0xcc] sm:$0xf]
  %v73 = vld [vmem:[%s0 + $0xd0] sm:$0xf]
  %v74 = vld [vmem:[%s0 + $0xd4] sm:$0xf]
  %v75 = vld [vmem:[%s0 + $0xd8] sm:$0xf]
  %v76 = vld [vmem:[%s0 + $0xdc] sm:$0xf]
  %v77 = vld [vmem:[%s0 + $0xe0] sm:$0xf]
  %v78 = vld [vmem:[%s0 + $0xe4] sm:$0xf]
  %v79 = vld [vmem:[%s0 + $0xe8] sm:$0xf]
  %v80 = vld [vmem:[%s0 + $0xec] sm:$0xf]
  %v81 = vld [vmem:[%s0 + $0xf0] sm:$0xf]
  %v82 = vld [vmem:[%s0 + $0xf4] sm:$0xf]
  %v83 = vld [vmem:[%s0 + $0xf8] sm:$0xf]
  %v84 = vld [vmem:[%s0 + $0xfc] sm:$0xf]
  %v85 = vld [vmem:[%s0 + $0x100] sm:$0xf]
  %v86 = vld [vmem:[%s0 + $0x104] sm:$0xf]
  %v87 = vld [vmem:[%s0 + $0x108] sm:$0xf]
  %v88 = vld [vmem:[%s0 + $0x10c] sm:$0xf]
  %v89 = vld [vmem:[%s0 + $0x110] sm:$0xf]
  %v90 = vld [vmem:[%s0 + $0x114] sm:$0xf]
  %v91 = vld [vmem:[%s0 + $0x118] sm:$0xf]
  %v92 = vld [vmem:[%s0 + $0x11c] sm:$0xf]
  %v93 = vld [vmem:[%s0 + $0x120] sm:$0xf]
  %v94 = vld [vmem:[%s0 + $0x124] sm:$0xf]
  %v95 = vld [vmem:[%s0 + $0x128] sm:$0xf]
  %v96 = vld [vmem:[%s0 + $0x12c] sm:$0xf]
  %v97 = vld [vmem:[%s0 + $0x130] sm:$0xf]
  %v98 = vld [vmem:[%s0 + $0x134] sm:$0xf]
  %v99 = vld [vmem:[%s0 + $0x138] sm:$0xf]
  %v100 = vld [vmem:[%s0 + $0x13c] sm:$0xf]
  %v101 = vld [vmem:[%s0 + $0x140] sm:$0xf]
  %v102 = vld [vmem:[%s0 + $0x144] sm:$0xf]
  %v103 = vld [vmem:[%s0 + $0x148] sm:$0xf]
  %v104 = vld [vmem:[%s0 + $0x14c] sm:$0xf]
  %v105 = vld [vmem:[%s0 + $0x150] sm:$0xf]
  %v106 = vld [vmem:[%s0 + $0x154] sm:$0xf]
  %v107 = vld [vmem:[%s0 + $0x158] sm:$0xf]
  %v108 = vld [vmem:[%s0 + $0x15c] sm:$0xf]
  %v109 = vld [vmem:[%s0 + $0x160] sm:$0xf]
  %v110 = vld [vmem:[%s0 + $0x164] sm:$0xf]
  %v111 = vld [vmem:[%s0 + $0x168] sm:$0xf]
  %v112 = vld [vmem:[%s0 + $0x16c] sm:$0xf]
  %v113 = vld [vmem:[%s0 + $0x170] sm:$0xf]
  %v114 = vld [vmem:[%s0 + $0x174] sm:$0xf]
  %v115 = vld [vmem:[%s0 + $0x178] sm:$0xf]
  %v116 = vld [vmem:[%s0 + $0x17c] sm:$0xf]
  %v117 = vld [vmem:[%s0 + $0x180] sm:$0xf]
  %v118 = vld [vmem:[%s0 + $0x184] sm:$0xf]
  %v119 = vld [vmem:[%s0 + $0x188] sm:$0xf]
  %v120 = vld [vmem:[%s0 + $0x18c] sm:$0xf]
  %v121 = vld [vmem:[%s0 + $0x190] sm:$0xf]
  %v122 = vld [vmem:[%s0 + $0x194] sm:$0xf]
  %v123 = vld [vmem:[%s0 + $0x198] sm:$0xf]
  %v124 = vld [vmem:[%s0 + $0x19c] sm:$0xf]
  %v125 = vld [vmem:[%s0 + $0x1a0] sm:$0xf]
  %v126 = vld [vmem:[%s0 + $0x1a4] sm:$0xf]
  %v127 = vld [vmem:[%s0 + $0x1a8] sm:$0xf]
  %v128 = vld [vmem:[%s0 + $0x1ac] sm:$0xf]
  %v129 = vld [vmem:[%s0 + $0x1b0] sm:$0xf]
  %v130 = vld [vmem:[%s0 + $0x1b4] sm:$0xf]
  %v131 = vld [vmem:[%s0 + $0x1b8] sm:$0xf]
  %v132 = vld [vmem:[%s0 + $0x1bc] sm:$0xf]
  %v133 = vld [vmem:[%s0 + $0x1c0] sm:$0xf]
  %v134 = vld [vmem:[%s0 + $0x1c4] sm:$0xf]
  %v135 = vld [vmem:[%s0 + $0x1c8] sm:$0xf]
  %v136 = vld [vmem:[%s0 + $0x1cc] sm:$0xf]
  %v137 = vld [vmem:[%s0 + $0x1d0] sm:$0xf]
  %v138 = vld [vmem:[%s0 + $0x1d4] sm:$0xf]
  %v139 = vld [vmem:[%s0 + $0x1d8] sm:$0xf]
  %v140 = vld [vmem:[%s0 + $0x1dc] sm:$0xf]
  %v141 = vld [vmem:[%s0 + $0x1e0] sm:$0xf]
  %v142 = vld [vmem:[%s0 + $0x1e4] sm:$0xf]
  %v143 = vld [vmem:[%s0 + $0x1e8] sm:$0xf]
  %v144 = vld [vmem:[%s0 + $0x1ec] sm:$0xf]
  %v145 = vld [vmem:[%s0 + $0x1f0] sm:$0xf]
  %v146 = vld [vmem:[%s0 + $0x1f4] sm:$0xf]
  %v147 = vld [vmem:[%s0 + $0x1f8] sm:$0xf]
  %v148 = vld [vmem:[%s0 + $0x1fc] sm:$0xf]
  %v149 = vld [vmem:[%s0 + $0x200] sm:$0xf]
  %v150 = vld [vmem:[%s0 + $0x204] sm:$0xf]
  %v151 = vld [vmem:[%s0 + $0x208] sm:$0xf]
  %v152 = vld [vmem:[%s0 + $0x20c] sm:$0xf]
  %v153 = vld [vmem:[%s0 + $0x210] sm:$0xf]
  %v154 = vld [vmem:[%s0 + $0x214] sm:$0xf]
  %v155 = vld [vmem:[%s0 + $0x218] sm:$0xf]
  %v156 = vld [vmem:[%s0 + $0x21c] sm:$0xf]
  %v157 = vld [vmem:[%s0 + $0x220] sm:$0xf]
  %v158 = vld [vmem:[%s0 + $0x224] sm:$0xf]
  %v159 = vld [vmem:[%s0 + $0x228] sm:$0xf]
  %v160 = vld [vmem:[%s0 + $0x22c] sm:$0xf]
  %v161 = vld [vmem:[%s0 + $0x230] sm:$0xf]
  %v162 = vld [vmem:[%s0 + $0x234] sm:$0xf]
  %v163 = vld [vmem:[%s0 + $0x238] sm:$0xf]
  %v164 = vld [vmem:[%s0 + $0x23c] sm:$0xf]
  %v165 = vld [vmem:[%s0 + $0x240] sm:$0xf]
  %v166 = vld [vmem:[%s0 + $0x244] sm:$0xf]
  %v167 = vld [vmem:[%s0 + $0x248] sm:$0xf]
  %v168 = vld [vmem:[%s0 + $0x24c] sm:$0xf]
  %v169 = vld [vmem:[%s0 + $0x250] sm:$0xf]
  %v170 = vld [vmem:[%s0 + $0x254] sm:$0xf]
  %v171 = vld [vmem:[%s0 + $0x258] sm:$0xf]
  %v172 = vld [vmem:[%s0 + $0x25c] sm:$0xf]
  %v173 = vld [vmem:[%s0 + $0x260] sm:$0xf]
  %v174 = vld [vmem:[%s0 + $0x264] sm:$0xf]
  %v175 = vld [vmem:[%s0 + $0x268] sm:$0xf]
  %v176 = vld [vmem:[%s0 + $0x26c] sm:$0xf]
  %v177 = vld [vmem:[%s0 + $0x270] sm:$0xf]
  %v178 = vld [vmem:[%s0 + $0x274] sm:$0xf]
  %v179 = vld [vmem:[%s0 + $0x278] sm:$0xf]
  %v180 = vld [vmem:[%s0 + $0x27c] sm:$0xf]
  %v181 = vld [vmem:[%s0 + $0x280] sm:$0xf]
  %v182 = vld [vmem:[%s0 + $0x284] sm:$0xf]
  %v183 = vld [vmem:[%s0 + $0x288] sm:$0xf]
  %v184 = vld [vmem:[%s0 + $0x28c] sm:$0xf]
  %v185 = vld [vmem:[%s0 + $0x290] sm:$0xf]
  %v186 = vld [vmem:[%s0 + $0x294] sm:$0xf]
  %v187 = vld [vmem:[%s0 + $0x298] sm:$0xf]
  %v188 = vld [vmem:[%s0 + $0x29c] sm:$0xf]
  %v189 = vld [vmem:[%s0 + $0x2a0] sm:$0xf]
  %v190 = vld [vmem:[%s0 + $0x2a4] sm:$0xf]
  %v191 = vld [vmem:[%s0 + $0x2a8] sm:$0xf]
  %v192 = vld [vmem:[%s0 + $0x2ac] sm:$0xf]
  %v193 = vld [vmem:[%s0 + $0x2b0] sm:$0xf]
  %v194 = vld [vmem:[%s0 + $0x2b4] sm:$0xf]
  %v195 = vld [vmem:[%s0 + $0x2b8] sm:$0xf]
  %v196 = vld [vmem:[%s0 + $0x2bc] sm:$0xf]
  %v197 = vld [vmem:[%s0 + $0x2c0] sm:$0xf]
  %v198 = vld [vmem:[%s0 + $0x2c4] sm:$0xf]
  %v199 = vld [vmem:[%s0 + $0x2c8] sm:$0xf]
  %v200 = vld [vmem:[%s0 + $0x2cc] sm:$0xf]
  %v201 = vld [vmem:[%s0 + $0x2d0] sm:$0xf]
  %v202 = vld [vmem:[%s0 + $0x2d4] sm:$0xf]
  %v203 = vld [vmem:[%s0 + $0x2d8] sm:$0xf]
  %v204 = vld [vmem:[%s0 + $0x2dc] sm:$0xf]
  %v205 = vld [vmem:[%s0 + $0x2e0] sm:$0xf]
  %v206 = vld [vmem:[%s0 + $0x2e4] sm:$0xf]
  %v207 = vld [vmem:[%s0 + $0x2e8] sm:$0xf]
  %v208 = vld [vmem:[%s0 + $0x2ec] sm:$0xf]
  %v209 = vld [vmem:[%s0 + $0x2f0] sm:$0xf]
  %v210 = vld [vmem:[%s0 + $0x2f4] sm:$0xf]
  %v211 = vld [vmem:[%s0 + $0x2f8] sm:$0xf]
  %v212 = vld [vmem:[%s0 + $0x2fc] sm:$0xf]
  %v213 = vld [vmem:[%s0 + $0x300] sm:$0xf]
  %v214 = vld [vmem:[%s0 + $0x304] sm:$0xf]
  %v215 = vld [vmem:[%s0 + $0x308] sm:$0xf]
  %v216 = vld [vmem:[%s0 + $0x30c] sm:$0xf]
  %v217 = vld [vmem:[%s0 + $0x310] sm:$0xf]
  %v218 = vld [vmem:[%s0 + $0x314] sm:$0xf]
  %v219 = vld [vmem:[%s0 + $0x318] sm:$0xf]
  %v220 = vld [vmem:[%s0 + $0x31c] sm:$0xf]
  %v221 = vld [vmem:[%s0 + $0x320] sm:$0xf]
  %v222 = vld [vmem:[%s0 + $0x324] sm:$0xf]
  %v223 = vld [vmem:[%s0 + $0x328] sm:$0xf]
  %v224 = vld [vmem:[%s0 + $0x32c] sm:$0xf]
  %v225 = vld [vmem:[%s0 + $0x330] sm:$0xf]
  %v226 = vld [vmem:[%s0 + $0x334] sm:$0xf]
  %v227 = vld [vmem:[%s0 + $0x338] sm:$0xf]
  %v228 = vld [vmem:[%s0 + $0x33c] sm:$0xf]
  %v229 = vld [vmem:[%s0 + $0x340] sm:$0xf]
  %v230 = vld [vmem:[%s0 + $0x344] sm:$0xf]
  %v231 = vld [vmem:[%s0 + $0x348] sm:$0xf]
  %v232 = vld [vmem:[%s0 + $0x34c] sm:$0xf]
  %v233 = vld [vmem:[%s0 + $0x350] sm:$0xf]
  %v234 = vld [vmem:[%s0 + $0x354] sm:$0xf]
  %v235 = vld [vmem:[%s0 + $0x358] sm:$0xf]
  %v236 = vld [vmem:[%s0 + $0x35c] sm:$0xf]
  %v237 = vld [vmem:[%s0 + $0x360] sm:$0xf]
  %v238 = vld [vmem:[%s0 + $0x364] sm:$0xf]
  %v239 = vld [vmem:[%s0 + $0x368] sm:$0xf]
  %v240 = vld [vmem:[%s0 + $0x36c] sm:$0xf]
  %v241 = vld [vmem:[%s0 + $0x370] sm:$0xf]
  %v242 = vld [vmem:[%s0 + $0x374] sm:$0xf]
  %v243 = vld [vmem:[%s0 + $0x378] sm:$0xf]
  %v244 = vld [vmem:[%s0 + $0x37c] sm:$0xf]
  %v245 = vld [vmem:[%s0 + $0x380] sm:$0xf]
  %v246 = vld [vmem:[%s0 + $0x384] sm:$0xf]
  %v247 = vld [vmem:[%s0 + $0x388] sm:$0xf]
  %v248 = vld [vmem:[%s0 + $0x38c] sm:$0xf]
  %v249 = vld [vmem:[%s0 + $0x390] sm:$0xf]
  %v250 = vld [vmem:[%s0 + $0x394] sm:$0xf]
  %v251 = vld [vmem:[%s0 + $0x398] sm:$0xf]
  %v252 = vld [vmem:[%s0 + $0x39c] sm:$0xf]
  %v253 = vld [vmem:[%s0 + $0x3a0] sm:$0xf]
  %v254 = vld [vmem:[%s0 + $0x3a4] sm:$0xf]
  %v255 = vld [vmem:[%s0 + $0x3a8] sm:$0xf]
  %v256 = vld [vmem:[%s0 + $0x3ac] sm:$0xf]
  %v257 = vld [vmem:[%s0 + $0x3b0] sm:$0xf]
  %v258 = vld [vmem:[%s0 + $0x3b4] sm:$0xf]
  %v259 = vld [vmem:[%s0 + $0x3b8] sm:$0xf]
  %v260 = vld [vmem:[%s0 + $0x3bc] sm:$0xf]
  %v261 = vld [vmem:[%s0 + $0x3c0] sm:$0xf]
  %v262 = vld [vmem:[%s0 + $0x3c4] sm:$0xf]
  %v263 = vld [vmem:[%s0 + $0x3c8] sm:$0xf]
  %v264 = vld [vmem:[%s0 + $0x3cc] sm:$0xf]
  %v265 = vld [vmem:[%s0 + $0x3d0] sm:$0xf]
  %v266 = vld [vmem:[%s0 + $0x3d4] sm:$0xf]
  %v267 = vld [vmem:[%s0 + $0x3d8] sm:$0xf]
  %v268 = vld [vmem:[%s0 + $0x3dc] sm:$0xf]
  %v269 = vld [vmem:[%s0 + $0x3e0] sm:$0xf]
  %v270 = vld [vmem:[%s0 + $0x3e4] sm:$0xf]
  %v271 = vld [vmem:[%s0 + $0x3e8] sm:$0xf]
  %v272 = vld [vmem:[%s0 + $0x3ec] sm:$0xf]
  %v273 = vld [vmem:[%s0 + $0x3f0] sm:$0xf]
  %v274 = vld [vmem:[%s0 + $0x3f4] sm:$0xf]
  %v275 = vld [vmem:[%s0 + $0x3f8] sm:$0xf]
  %v276 = vld [vmem:[%s0 + $0x3fc] sm:$0xf]
  %v277 = vld [vmem:[%s1] sm:$0xf]
  %v278 = vld [vmem:[%s1 + $0x4] sm:$0xf]
  %v279 = vld [vmem:[%s1 + $0x8] sm:$0xf]
  %v280 = vld [vmem:[%s1 + $0xc] sm:$0xf]
  %v281 = vld [vmem:[%s1 + $0x10] sm:$0xf]
  %v282 = vld [vmem:[%s1 + $0x14] sm:$0xf]
  %v283 = vld [vmem:[%s2] sm:$0x1]
  %v285 = vlaneseq
  %v286 = vshrl.u32 %v285, 7
  %v287 = vsub.s32 0, %v286
  %v288 = vrot.slane %v283, %v287
  %v546 = vunpack.c.l.b16 %v21
  %v547 = vunpack.c.l.b16 %v22
  %v548 = vunpack.c.l.b16 %v23
  %v549 = vunpack.c.l.b16 %v24
  %v550 = vunpack.c.l.b16 %v25
  %v551 = vunpack.c.l.b16 %v26
  %v552 = vunpack.c.l.b16 %v27
  %v553 = vunpack.c.l.b16 %v28
  %v554 = vunpack.c.l.b16 %v29
  %v555 = vunpack.c.l.b16 %v30
  %v556 = vunpack.c.l.b16 %v31
  %v557 = vunpack.c.l.b16 %v32
  %v558 = vunpack.c.l.b16 %v33
  %v559 = vunpack.c.l.b16 %v34
  %v560 = vunpack.c.l.b16 %v35
  %v561 = vunpack.c.l.b16 %v36
  %v562 = vunpack.c.l.b16 %v37
  %v563 = vunpack.c.l.b16 %v38
  %v564 = vunpack.c.l.b16 %v39
  %v565 = vunpack.c.l.b16 %v40
  %v566 = vunpack.c.l.b16 %v41
  %v567 = vunpack.c.l.b16 %v42
  %v568 = vunpack.c.l.b16 %v43
  %v569 = vunpack.c.l.b16 %v44
  %v570 = vunpack.c.l.b16 %v45
  %v571 = vunpack.c.l.b16 %v46
  %v572 = vunpack.c.l.b16 %v47
  %v573 = vunpack.c.l.b16 %v48
  %v574 = vunpack.c.l.b16 %v49
  %v575 = vunpack.c.l.b16 %v50
  %v576 = vunpack.c.l.b16 %v51
  %v577 = vunpack.c.l.b16 %v52
  %v578 = vunpack.c.l.b16 %v53
  %v579 = vunpack.c.l.b16 %v54
  %v580 = vunpack.c.l.b16 %v55
  %v581 = vunpack.c.l.b16 %v56
  %v582 = vunpack.c.l.b16 %v57
  %v583 = vunpack.c.l.b16 %v58
  %v584 = vunpack.c.l.b16 %v59
  %v585 = vunpack.c.l.b16 %v60
  %v586 = vunpack.c.l.b16 %v61
  %v587 = vunpack.c.l.b16 %v62
  %v588 = vunpack.c.l.b16 %v63
  %v589 = vunpack.c.l.b16 %v64
  %v590 = vunpack.c.l.b16 %v65
  %v591 = vunpack.c.l.b16 %v66
  %v592 = vunpack.c.l.b16 %v67
  %v593 = vunpack.c.l.b16 %v68
  %v594 = vunpack.c.l.b16 %v69
  %v595 = vunpack.c.l.b16 %v70
  %v596 = vunpack.c.l.b16 %v71
  %v597 = vunpack.c.l.b16 %v72
  %v598 = vunpack.c.l.b16 %v73
  %v599 = vunpack.c.l.b16 %v74
  %v600 = vunpack.c.l.b16 %v75
  %v601 = vunpack.c.l.b16 %v76
  %v602 = vunpack.c.l.b16 %v77
  %v603 = vunpack.c.l.b16 %v78
  %v604 = vunpack.c.l.b16 %v79
  %v605 = vunpack.c.l.b16 %v80
  %v606 = vunpack.c.l.b16 %v81
  %v607 = vunpack.c.l.b16 %v82
  %v608 = vunpack.c.l.b16 %v83
  %v609 = vunpack.c.l.b16 %v84
  %v610 = vunpack.c.l.b16 %v85
  %v611 = vunpack.c.l.b16 %v86
  %v612 = vunpack.c.l.b16 %v87
  %v613 = vunpack.c.l.b16 %v88
  %v614 = vunpack.c.l.b16 %v89
  %v615 = vunpack.c.l.b16 %v90
  %v616 = vunpack.c.l.b16 %v91
  %v617 = vunpack.c.l.b16 %v92
  %v618 = vunpack.c.l.b16 %v93
  %v619 = vunpack.c.l.b16 %v94
  %v620 = vunpack.c.l.b16 %v95
  %v621 = vunpack.c.l.b16 %v96
  %v622 = vunpack.c.l.b16 %v97
  %v623 = vunpack.c.l.b16 %v98
  %v624 = vunpack.c.l.b16 %v99
  %v625 = vunpack.c.l.b16 %v100
  %v626 = vunpack.c.l.b16 %v101
  %v627 = vunpack.c.l.b16 %v102
  %v628 = vunpack.c.l.b16 %v103
  %v629 = vunpack.c.l.b16 %v104
  %v630 = vunpack.c.l.b16 %v105
  %v631 = vunpack.c.l.b16 %v106
  %v632 = vunpack.c.l.b16 %v107
  %v633 = vunpack.c.l.b16 %v108
  %v634 = vunpack.c.l.b16 %v109
  %v635 = vunpack.c.l.b16 %v110
  %v636 = vunpack.c.l.b16 %v111
  %v637 = vunpack.c.l.b16 %v112
  %v638 = vunpack.c.l.b16 %v113
  %v639 = vunpack.c.l.b16 %v114
  %v640 = vunpack.c.l.b16 %v115
  %v641 = vunpack.c.l.b16 %v116
  %v642 = vunpack.c.l.b16 %v117
  %v643 = vunpack.c.l.b16 %v118
  %v644 = vunpack.c.l.b16 %v119
  %v645 = vunpack.c.l.b16 %v120
  %v646 = vunpack.c.l.b16 %v121
  %v647 = vunpack.c.l.b16 %v122
  %v648 = vunpack.c.l.b16 %v123
  %v649 = vunpack.c.l.b16 %v124
  %v650 = vunpack.c.l.b16 %v125
  %v651 = vunpack.c.l.b16 %v126
  %v652 = vunpack.c.l.b16 %v127
  %v653 = vunpack.c.l.b16 %v128
  %v654 = vunpack.c.l.b16 %v129
  %v655 = vunpack.c.l.b16 %v130
  %v656 = vunpack.c.l.b16 %v131
  %v657 = vunpack.c.l.b16 %v132
  %v658 = vunpack.c.l.b16 %v133
  %v659 = vunpack.c.l.b16 %v134
  %v660 = vunpack.c.l.b16 %v135
  %v661 = vunpack.c.l.b16 %v136
  %v662 = vunpack.c.l.b16 %v137
  %v663 = vunpack.c.l.b16 %v138
  %v664 = vunpack.c.l.b16 %v139
  %v665 = vunpack.c.l.b16 %v140
  %v666 = vunpack.c.l.b16 %v141
  %v667 = vunpack.c.l.b16 %v142
  %v668 = vunpack.c.l.b16 %v143
  %v669 = vunpack.c.l.b16 %v144
  %v670 = vunpack.c.l.b16 %v145
  %v671 = vunpack.c.l.b16 %v146
  %v672 = vunpack.c.l.b16 %v147
  %v673 = vunpack.c.l.b16 %v148
  %v674 = vunpack.c.l.b16 %v149
  %v675 = vunpack.c.l.b16 %v150
  %v676 = vunpack.c.l.b16 %v151
  %v677 = vunpack.c.l.b16 %v152
  %v678 = vunpack.c.l.b16 %v153
  %v679 = vunpack.c.l.b16 %v154
  %v680 = vunpack.c.l.b16 %v155
  %v681 = vunpack.c.l.b16 %v156
  %v682 = vunpack.c.l.b16 %v157
  %v683 = vunpack.c.l.b16 %v158
  %v684 = vunpack.c.l.b16 %v159
  %v685 = vunpack.c.l.b16 %v160
  %v686 = vunpack.c.l.b16 %v161
  %v687 = vunpack.c.l.b16 %v162
  %v688 = vunpack.c.l.b16 %v163
  %v689 = vunpack.c.l.b16 %v164
  %v690 = vunpack.c.l.b16 %v165
  %v691 = vunpack.c.l.b16 %v166
  %v692 = vunpack.c.l.b16 %v167
  %v693 = vunpack.c.l.b16 %v168
  %v694 = vunpack.c.l.b16 %v169
  %v695 = vunpack.c.l.b16 %v170
  %v696 = vunpack.c.l.b16 %v171
  %v697 = vunpack.c.l.b16 %v172
  %v698 = vunpack.c.l.b16 %v173
  %v699 = vunpack.c.l.b16 %v174
  %v700 = vunpack.c.l.b16 %v175
  %v701 = vunpack.c.l.b16 %v176
  %v702 = vunpack.c.l.b16 %v177
  %v703 = vunpack.c.l.b16 %v178
  %v704 = vunpack.c.l.b16 %v179
  %v705 = vunpack.c.l.b16 %v180
  %v706 = vunpack.c.l.b16 %v181
  %v707 = vunpack.c.l.b16 %v182
  %v708 = vunpack.c.l.b16 %v183
  %v709 = vunpack.c.l.b16 %v184
  %v710 = vunpack.c.l.b16 %v185
  %v711 = vunpack.c.l.b16 %v186
  %v712 = vunpack.c.l.b16 %v187
  %v713 = vunpack.c.l.b16 %v188
  %v714 = vunpack.c.l.b16 %v189
  %v715 = vunpack.c.l.b16 %v190
  %v716 = vunpack.c.l.b16 %v191
  %v717 = vunpack.c.l.b16 %v192
  %v718 = vunpack.c.l.b16 %v193
  %v719 = vunpack.c.l.b16 %v194
  %v720 = vunpack.c.l.b16 %v195
  %v721 = vunpack.c.l.b16 %v196
  %v722 = vunpack.c.l.b16 %v197
  %v723 = vunpack.c.l.b16 %v198
  %v724 = vunpack.c.l.b16 %v199
  %v725 = vunpack.c.l.b16 %v200
  %v726 = vunpack.c.l.b16 %v201
  %v727 = vunpack.c.l.b16 %v202
  %v728 = vunpack.c.l.b16 %v203
  %v729 = vunpack.c.l.b16 %v204
  %v730 = vunpack.c.l.b16 %v205
  %v731 = vunpack.c.l.b16 %v206
  %v732 = vunpack.c.l.b16 %v207
  %v733 = vunpack.c.l.b16 %v208
  %v734 = vunpack.c.l.b16 %v209
  %v735 = vunpack.c.l.b16 %v210
  %v736 = vunpack.c.l.b16 %v211
  %v737 = vunpack.c.l.b16 %v212
  %v738 = vunpack.c.l.b16 %v213
  %v739 = vunpack.c.l.b16 %v214
  %v740 = vunpack.c.l.b16 %v215
  %v741 = vunpack.c.l.b16 %v216
  %v742 = vunpack.c.l.b16 %v217
  %v743 = vunpack.c.l.b16 %v218
  %v744 = vunpack.c.l.b16 %v219
  %v745 = vunpack.c.l.b16 %v220
  %v746 = vunpack.c.l.b16 %v221
  %v747 = vunpack.c.l.b16 %v222
  %v748 = vunpack.c.l.b16 %v223
  %v749 = vunpack.c.l.b16 %v224
  %v750 = vunpack.c.l.b16 %v225
  %v751 = vunpack.c.l.b16 %v226
  %v752 = vunpack.c.l.b16 %v227
  %v753 = vunpack.c.l.b16 %v228
  %v754 = vunpack.c.l.b16 %v229
  %v755 = vunpack.c.l.b16 %v230
  %v756 = vunpack.c.l.b16 %v231
  %v757 = vunpack.c.l.b16 %v232
  %v758 = vunpack.c.l.b16 %v233
  %v759 = vunpack.c.l.b16 %v234
  %v760 = vunpack.c.l.b16 %v235
  %v761 = vunpack.c.l.b16 %v236
  %v762 = vunpack.c.l.b16 %v237
  %v763 = vunpack.c.l.b16 %v238
  %v764 = vunpack.c.l.b16 %v239
  %v765 = vunpack.c.l.b16 %v240
  %v766 = vunpack.c.l.b16 %v241
  %v767 = vunpack.c.l.b16 %v242
  %v768 = vunpack.c.l.b16 %v243
  %v769 = vunpack.c.l.b16 %v244
  %v770 = vunpack.c.l.b16 %v245
  %v771 = vunpack.c.l.b16 %v246
  %v772 = vunpack.c.l.b16 %v247
  %v773 = vunpack.c.l.b16 %v248
  %v774 = vunpack.c.l.b16 %v249
  %v775 = vunpack.c.l.b16 %v250
  %v776 = vunpack.c.l.b16 %v251
  %v777 = vunpack.c.l.b16 %v252
  %v778 = vunpack.c.l.b16 %v253
  %v779 = vunpack.c.l.b16 %v254
  %v780 = vunpack.c.l.b16 %v255
  %v781 = vunpack.c.l.b16 %v256
  %v782 = vunpack.c.l.b16 %v257
  %v783 = vunpack.c.l.b16 %v258
  %v784 = vunpack.c.l.b16 %v259
  %v785 = vunpack.c.l.b16 %v260
  %v786 = vunpack.c.l.b16 %v261
  %v787 = vunpack.c.l.b16 %v262
  %v788 = vunpack.c.l.b16 %v263
  %v789 = vunpack.c.l.b16 %v264
  %v790 = vunpack.c.l.b16 %v265
  %v791 = vunpack.c.l.b16 %v266
  %v792 = vunpack.c.l.b16 %v267
  %v793 = vunpack.c.l.b16 %v268
  %v794 = vunpack.c.l.b16 %v269
  %v795 = vunpack.c.l.b16 %v270
  %v796 = vunpack.c.l.b16 %v271
  %v797 = vunpack.c.l.b16 %v272
  %v798 = vunpack.c.l.b16 %v273
  %v799 = vunpack.c.l.b16 %v274
  %v800 = vunpack.c.l.b16 %v275
  %v801 = vunpack.c.l.b16 %v276
  %v802 = vpack.c.b16 %v547, %v546
  %v803 = vpack.c.b16 %v549, %v548
  %v804 = vpack.c.b16 %v551, %v550
  %v805 = vpack.c.b16 %v553, %v552
  %v806 = vpack.c.b16 %v555, %v554
  %v807 = vpack.c.b16 %v557, %v556
  %v808 = vpack.c.b16 %v559, %v558
  %v809 = vpack.c.b16 %v561, %v560
  %v810 = vpack.c.b16 %v563, %v562
  %v811 = vpack.c.b16 %v565, %v564
  %v812 = vpack.c.b16 %v567, %v566
  %v813 = vpack.c.b16 %v569, %v568
  %v814 = vpack.c.b16 %v571, %v570
  %v815 = vpack.c.b16 %v573, %v572
  %v816 = vpack.c.b16 %v575, %v574
  %v817 = vpack.c.b16 %v577, %v576
  %v818 = vpack.c.b16 %v579, %v578
  %v819 = vpack.c.b16 %v581, %v580
  %v820 = vpack.c.b16 %v583, %v582
  %v821 = vpack.c.b16 %v585, %v584
  %v822 = vpack.c.b16 %v587, %v586
  %v823 = vpack.c.b16 %v589, %v588
  %v824 = vpack.c.b16 %v591, %v590
  %v825 = vpack.c.b16 %v593, %v592
  %v826 = vpack.c.b16 %v595, %v594
  %v827 = vpack.c.b16 %v597, %v596
  %v828 = vpack.c.b16 %v599, %v598
  %v829 = vpack.c.b16 %v601, %v600
  %v830 = vpack.c.b16 %v603, %v602
  %v831 = vpack.c.b16 %v605, %v604
  %v832 = vpack.c.b16 %v607, %v606
  %v833 = vpack.c.b16 %v609, %v608
  %v834 = vpack.c.b16 %v611, %v610
  %v835 = vpack.c.b16 %v613, %v612
  %v836 = vpack.c.b16 %v615, %v614
  %v837 = vpack.c.b16 %v617, %v616
  %v838 = vpack.c.b16 %v619, %v618
  %v839 = vpack.c.b16 %v621, %v620
  %v840 = vpack.c.b16 %v623, %v622
  %v841 = vpack.c.b16 %v625, %v624
  %v842 = vpack.c.b16 %v627, %v626
  %v843 = vpack.c.b16 %v629, %v628
  %v844 = vpack.c.b16 %v631, %v630
  %v845 = vpack.c.b16 %v633, %v632
  %v846 = vpack.c.b16 %v635, %v634
  %v847 = vpack.c.b16 %v637, %v636
  %v848 = vpack.c.b16 %v639, %v638
  %v849 = vpack.c.b16 %v641, %v640
  %v850 = vpack.c.b16 %v643, %v642
  %v851 = vpack.c.b16 %v645, %v644
  %v852 = vpack.c.b16 %v647, %v646
  %v853 = vpack.c.b16 %v649, %v648
  %v854 = vpack.c.b16 %v651, %v650
  %v855 = vpack.c.b16 %v653, %v652
  %v856 = vpack.c.b16 %v655, %v654
  %v857 = vpack.c.b16 %v657, %v656
  %v858 = vpack.c.b16 %v659, %v658
  %v859 = vpack.c.b16 %v661, %v660
  %v860 = vpack.c.b16 %v663, %v662
  %v861 = vpack.c.b16 %v665, %v664
  %v862 = vpack.c.b16 %v667, %v666
  %v863 = vpack.c.b16 %v669, %v668
  %v864 = vpack.c.b16 %v671, %v670
  %v865 = vpack.c.b16 %v673, %v672
  %v866 = vpack.c.b16 %v675, %v674
  %v867 = vpack.c.b16 %v677, %v676
  %v868 = vpack.c.b16 %v679, %v678
  %v869 = vpack.c.b16 %v681, %v680
  %v870 = vpack.c.b16 %v683, %v682
  %v871 = vpack.c.b16 %v685, %v684
  %v872 = vpack.c.b16 %v687, %v686
  %v873 = vpack.c.b16 %v689, %v688
  %v874 = vpack.c.b16 %v691, %v690
  %v875 = vpack.c.b16 %v693, %v692
  %v876 = vpack.c.b16 %v695, %v694
  %v877 = vpack.c.b16 %v697, %v696
  %v878 = vpack.c.b16 %v699, %v698
  %v879 = vpack.c.b16 %v701, %v700
  %v880 = vpack.c.b16 %v703, %v702
  %v881 = vpack.c.b16 %v705, %v704
  %v882 = vpack.c.b16 %v707, %v706
  %v883 = vpack.c.b16 %v709, %v708
  %v884 = vpack.c.b16 %v711, %v710
  %v885 = vpack.c.b16 %v713, %v712
  %v886 = vpack.c.b16 %v715, %v714
  %v887 = vpack.c.b16 %v717, %v716
  %v888 = vpack.c.b16 %v719, %v718
  %v889 = vpack.c.b16 %v721, %v720
  %v890 = vpack.c.b16 %v723, %v722
  %v891 = vpack.c.b16 %v725, %v724
  %v892 = vpack.c.b16 %v727, %v726
  %v893 = vpack.c.b16 %v729, %v728
  %v894 = vpack.c.b16 %v731, %v730
  %v895 = vpack.c.b16 %v733, %v732
  %v896 = vpack.c.b16 %v735, %v734
  %v897 = vpack.c.b16 %v737, %v736
  %v898 = vpack.c.b16 %v739, %v738
  %v899 = vpack.c.b16 %v741, %v740
  %v900 = vpack.c.b16 %v743, %v742
  %v901 = vpack.c.b16 %v745, %v744
  %v902 = vpack.c.b16 %v747, %v746
  %v903 = vpack.c.b16 %v749, %v748
  %v904 = vpack.c.b16 %v751, %v750
  %v905 = vpack.c.b16 %v753, %v752
  %v906 = vpack.c.b16 %v755, %v754
  %v907 = vpack.c.b16 %v757, %v756
  %v908 = vpack.c.b16 %v759, %v758
  %v909 = vpack.c.b16 %v761, %v760
  %v910 = vpack.c.b16 %v763, %v762
  %v911 = vpack.c.b16 %v765, %v764
  %v912 = vpack.c.b16 %v767, %v766
  %v913 = vpack.c.b16 %v769, %v768
  %v914 = vpack.c.b16 %v771, %v770
  %v915 = vpack.c.b16 %v773, %v772
  %v916 = vpack.c.b16 %v775, %v774
  %v917 = vpack.c.b16 %v777, %v776
  %v918 = vpack.c.b16 %v779, %v778
  %v919 = vpack.c.b16 %v781, %v780
  %v920 = vpack.c.b16 %v783, %v782
  %v921 = vpack.c.b16 %v785, %v784
  %v922 = vpack.c.b16 %v787, %v786
  %v923 = vpack.c.b16 %v789, %v788
  %v924 = vpack.c.b16 %v791, %v790
  %v925 = vpack.c.b16 %v793, %v792
  %v926 = vpack.c.b16 %v795, %v794
  %v927 = vpack.c.b16 %v797, %v796
  %v928 = vpack.c.b16 %v799, %v798
  %v929 = vpack.c.b16 %v801, %v800
  %v936 = vunpack.c.l.b16 %v277
  %v937 = vunpack.c.l.b16 %v278
  %v938 = vunpack.c.l.b16 %v279
  %v939 = vunpack.c.l.b16 %v280
  %v940 = vunpack.c.l.b16 %v281
  %v941 = vunpack.c.l.b16 %v282
  %v942 = vpack.c.b16 %v937, %v936
  %v943 = vpack.c.b16 %v939, %v938
  %v944 = vpack.c.b16 %v941, %v940
  %vm948 = vcmask 392192
  %v950 = vsel %vm948, %v802, 0
  %v953 = vsel %vm948, %v803, 0
  %v956 = vsel %vm948, %v804, 0
  %v959 = vsel %vm948, %v805, 0
  %v962 = vsel %vm948, %v806, 0
  %v965 = vsel %vm948, %v807, 0
  %v968 = vsel %vm948, %v808, 0
  %v971 = vsel %vm948, %v809, 0
  %v974 = vsel %vm948, %v810, 0
  %v977 = vsel %vm948, %v811, 0
  %v980 = vsel %vm948, %v812, 0
  %v983 = vsel %vm948, %v813, 0
  %v986 = vsel %vm948, %v814, 0
  %v989 = vsel %vm948, %v815, 0
  %v992 = vsel %vm948, %v816, 0
  %v995 = vsel %vm948, %v817, 0
  %v998 = vsel %vm948, %v818, 0
  %v1001 = vsel %vm948, %v819, 0
  %v1004 = vsel %vm948, %v820, 0
  %v1007 = vsel %vm948, %v821, 0
  %v1010 = vsel %vm948, %v822, 0
  %v1013 = vsel %vm948, %v823, 0
  %v1016 = vsel %vm948, %v824, 0
  %v1019 = vsel %vm948, %v825, 0
  %v1022 = vsel %vm948, %v826, 0
  %v1025 = vsel %vm948, %v827, 0
  %v1028 = vsel %vm948, %v828, 0
  %v1031 = vsel %vm948, %v829, 0
  %v1034 = vsel %vm948, %v830, 0
  %v1037 = vsel %vm948, %v831, 0
  %v1040 = vsel %vm948, %v832, 0
  %v1043 = vsel %vm948, %v833, 0
  %v1046 = vsel %vm948, %v834, 0
  %v1049 = vsel %vm948, %v835, 0
  %v1052 = vsel %vm948, %v836, 0
  %v1055 = vsel %vm948, %v837, 0
  %v1058 = vsel %vm948, %v838, 0
  %v1061 = vsel %vm948, %v839, 0
  %v1064 = vsel %vm948, %v840, 0
  %v1067 = vsel %vm948, %v841, 0
  %v1070 = vsel %vm948, %v842, 0
  %v1073 = vsel %vm948, %v843, 0
  %v1076 = vsel %vm948, %v844, 0
  %v1079 = vsel %vm948, %v845, 0
  %v1082 = vsel %vm948, %v846, 0
  %v1085 = vsel %vm948, %v847, 0
  %v1088 = vsel %vm948, %v848, 0
  %v1091 = vsel %vm948, %v849, 0
  %v1094 = vsel %vm948, %v850, 0
  %v1097 = vsel %vm948, %v851, 0
  %v1100 = vsel %vm948, %v852, 0
  %v1103 = vsel %vm948, %v853, 0
  %v1106 = vsel %vm948, %v854, 0
  %v1109 = vsel %vm948, %v855, 0
  %v1112 = vsel %vm948, %v856, 0
  %v1115 = vsel %vm948, %v857, 0
  %v1118 = vsel %vm948, %v858, 0
  %v1121 = vsel %vm948, %v859, 0
  %v1124 = vsel %vm948, %v860, 0
  %v1127 = vsel %vm948, %v861, 0
  %v1130 = vsel %vm948, %v862, 0
  %v1133 = vsel %vm948, %v863, 0
  %v1136 = vsel %vm948, %v864, 0
  %v1139 = vsel %vm948, %v865, 0
  %v1142 = vsel %vm948, %v866, 0
  %v1145 = vsel %vm948, %v867, 0
  %v1148 = vsel %vm948, %v868, 0
  %v1151 = vsel %vm948, %v869, 0
  %v1154 = vsel %vm948, %v870, 0
  %v1157 = vsel %vm948, %v871, 0
  %v1160 = vsel %vm948, %v872, 0
  %v1163 = vsel %vm948, %v873, 0
  %v1166 = vsel %vm948, %v874, 0
  %v1169 = vsel %vm948, %v875, 0
  %v1172 = vsel %vm948, %v876, 0
  %v1175 = vsel %vm948, %v877, 0
  %v1178 = vsel %vm948, %v878, 0
  %v1181 = vsel %vm948, %v879, 0
  %v1184 = vsel %vm948, %v880, 0
  %v1187 = vsel %vm948, %v881, 0
  %v1190 = vsel %vm948, %v882, 0
  %v1193 = vsel %vm948, %v883, 0
  %v1196 = vsel %vm948, %v884, 0
  %v1199 = vsel %vm948, %v885, 0
  %v1202 = vsel %vm948, %v886, 0
  %v1205 = vsel %vm948, %v887, 0
  %v1208 = vsel %vm948, %v888, 0
  %v1211 = vsel %vm948, %v889, 0
  %v1214 = vsel %vm948, %v890, 0
  %v1217 = vsel %vm948, %v891, 0
  %v1220 = vsel %vm948, %v892, 0
  %v1223 = vsel %vm948, %v893, 0
  %v1226 = vsel %vm948, %v894, 0
  %v1229 = vsel %vm948, %v895, 0
  %v1232 = vsel %vm948, %v896, 0
  %v1235 = vsel %vm948, %v897, 0
  %v1238 = vsel %vm948, %v898, 0
  %v1241 = vsel %vm948, %v899, 0
  %v1244 = vsel %vm948, %v900, 0
  %v1247 = vsel %vm948, %v901, 0
  %v1250 = vsel %vm948, %v902, 0
  %v1253 = vsel %vm948, %v903, 0
  %v1256 = vsel %vm948, %v904, 0
  %v1259 = vsel %vm948, %v905, 0
  %v1262 = vsel %vm948, %v906, 0
  %v1265 = vsel %vm948, %v907, 0
  %v1268 = vsel %vm948, %v908, 0
  %v1271 = vsel %vm948, %v909, 0
  %v1274 = vsel %vm948, %v910, 0
  %v1277 = vsel %vm948, %v911, 0
  %v1280 = vsel %vm948, %v912, 0
  %v1283 = vsel %vm948, %v913, 0
  %v1286 = vsel %vm948, %v914, 0
  %v1289 = vsel %vm948, %v915, 0
  %v1292 = vsel %vm948, %v916, 0
  %v1295 = vsel %vm948, %v917, 0
  %v1298 = vsel %vm948, %v918, 0
  %v1301 = vsel %vm948, %v919, 0
  %v1304 = vsel %vm948, %v920, 0
  %v1307 = vsel %vm948, %v921, 0
  %v1310 = vsel %vm948, %v922, 0
  %v1313 = vsel %vm948, %v923, 0
  %v1316 = vsel %vm948, %v924, 0
  %v1319 = vsel %vm948, %v925, 0
  %v1322 = vsel %vm948, %v926, 0
  %v1325 = vsel %vm948, %v927, 0
  %v1328 = vsel %vm948, %v928, 0
  %v1331 = vsel %vm948, %v929, 0
  %1333 = vmatprep.subr.bf16.mxu0 0
  %1334 = vmatpush1.bf16.msra.mxu0 0
  %1335 = vmatprep.subr.bf16.mxu0 0
  %1336 = vmatpush1.bf16.msra.mxu0 0
  %1337 = vmatprep.subr.bf16.mxu0 0
  %1338 = vmatpush1.bf16.msra.mxu0 0
  %1339 = vmatprep.subr.bf16.mxu0 0
  %1340 = vmatpush1.bf16.msra.mxu0 0
  %1341 = vmatprep.subr.bf16.mxu0 0
  %1342 = vmatpush1.bf16.msra.mxu0 0
  %1343 = vmatprep.subr.bf16.mxu0 0
  %1344 = vmatpush1.bf16.msra.mxu0 %v944
  %1345 = vmatprep.subr.bf16.mxu0 0
  %1346 = vmatpush1.bf16.msra.mxu0 %v943
  %1347 = vmatprep.subr.bf16.mxu0 0
  %1348 = vmatpush1.bf16.msra.mxu0 %v942
  %1349 = vmatprep.subr.bf16.mxu0 0
  %1350 = vmatpush2.bf16.msra.mxu0 0
  %1351 = vmatprep.subr.bf16.mxu0 0
  %1352 = vmatpush2.bf16.msra.mxu0 0
  %1353 = vmatprep.subr.bf16.mxu0 0
  %1354 = vmatpush2.bf16.msra.mxu0 0
  %1355 = vmatprep.subr.bf16.mxu0 0
  %1356 = vmatpush2.bf16.msra.mxu0 0
  %1357 = vmatprep.subr.bf16.mxu0 0
  %1358 = vmatpush2.bf16.msra.mxu0 0
  %1359 = vmatprep.subr.bf16.mxu0 0
  %1360 = vmatpush2.bf16.msra.mxu0 0
  %1361 = vmatprep.subr.bf16.mxu0 0
  %1362 = vmatpush2.bf16.msra.mxu0 0
  %1363 = vmatprep.subr.bf16.mxu0 0
  %1364 = vmatpush2.bf16.msra.mxu0 0
  %1365 = vmatprep.mubr.bf16.mxu0 0
  %1366 = vmatmul.mubr.bf16.gmra.mxu0 %v950
  %v1367 = vpop.f32.mrf.mxu0
  %v1368 = vadd.f32 %v288, %v1367
  %v1369 = vpop.f32.mrf.mxu0
  %v1370 = vpop.f32.mrf.mxu0
  %v1371 = vadd.f32 %v288, %v1370
  %v1372 = vpop.f32.mrf.mxu0
  %1373 = vmatprep.mubr.bf16.mxu0 0
  %1374 = vmatmul.mubr.bf16.gmra.mxu0 %v953
  %v1375 = vpop.f32.mrf.mxu0
  %v1376 = vadd.f32 %v288, %v1375
  %v1377 = vpop.f32.mrf.mxu0
  %v1378 = vpop.f32.mrf.mxu0
  %v1379 = vadd.f32 %v288, %v1378
  %v1380 = vpop.f32.mrf.mxu0
  %1381 = vmatprep.mubr.bf16.mxu0 0
  %1382 = vmatmul.mubr.bf16.gmra.mxu0 %v956
  %v1383 = vpop.f32.mrf.mxu0
  %v1384 = vadd.f32 %v288, %v1383
  %v1385 = vpop.f32.mrf.mxu0
  %v1386 = vpop.f32.mrf.mxu0
  %v1387 = vadd.f32 %v288, %v1386
  %v1388 = vpop.f32.mrf.mxu0
  %1389 = vmatprep.mubr.bf16.mxu0 0
  %1390 = vmatmul.mubr.bf16.gmra.mxu0 %v959
  %v1391 = vpop.f32.mrf.mxu0
  %v1392 = vadd.f32 %v288, %v1391
  %v1393 = vpop.f32.mrf.mxu0
  %v1394 = vpop.f32.mrf.mxu0
  %v1395 = vadd.f32 %v288, %v1394
  %v1396 = vpop.f32.mrf.mxu0
  %1397 = vmatprep.mubr.bf16.mxu0 0
  %1398 = vmatmul.mubr.bf16.gmra.mxu0 %v962
  %v1399 = vpop.f32.mrf.mxu0
  %v1400 = vadd.f32 %v288, %v1399
  %v1401 = vpop.f32.mrf.mxu0
  %v1402 = vpop.f32.mrf.mxu0
  %v1403 = vadd.f32 %v288, %v1402
  %v1404 = vpop.f32.mrf.mxu0
  %1405 = vmatprep.mubr.bf16.mxu0 0
  %1406 = vmatmul.mubr.bf16.gmra.mxu0 %v965
  %v1407 = vpop.f32.mrf.mxu0
  %v1408 = vadd.f32 %v288, %v1407
  %v1409 = vpop.f32.mrf.mxu0
  %v1410 = vpop.f32.mrf.mxu0
  %v1411 = vadd.f32 %v288, %v1410
  %v1412 = vpop.f32.mrf.mxu0
  %1413 = vmatprep.mubr.bf16.mxu0 0
  %1414 = vmatmul.mubr.bf16.gmra.mxu0 %v968
  %v1415 = vpop.f32.mrf.mxu0
  %v1416 = vadd.f32 %v288, %v1415
  %v1417 = vpop.f32.mrf.mxu0
  %v1418 = vpop.f32.mrf.mxu0
  %v1419 = vadd.f32 %v288, %v1418
  %v1420 = vpop.f32.mrf.mxu0
  %1421 = vmatprep.mubr.bf16.mxu0 0
  %1422 = vmatmul.mubr.bf16.gmra.mxu0 %v971
  %v1423 = vpop.f32.mrf.mxu0
  %v1424 = vadd.f32 %v288, %v1423
  %v1425 = vpop.f32.mrf.mxu0
  %v1426 = vpop.f32.mrf.mxu0
  %v1427 = vadd.f32 %v288, %v1426
  %v1428 = vpop.f32.mrf.mxu0
  %1429 = vmatprep.mubr.bf16.mxu0 0
  %1430 = vmatmul.mubr.bf16.gmra.mxu0 %v974
  %v1431 = vpop.f32.mrf.mxu0
  %v1432 = vadd.f32 %v288, %v1431
  %v1433 = vpop.f32.mrf.mxu0
  %v1434 = vpop.f32.mrf.mxu0
  %v1435 = vadd.f32 %v288, %v1434
  %v1436 = vpop.f32.mrf.mxu0
  %1437 = vmatprep.mubr.bf16.mxu0 0
  %1438 = vmatmul.mubr.bf16.gmra.mxu0 %v977
  %v1439 = vpop.f32.mrf.mxu0
  %v1440 = vadd.f32 %v288, %v1439
  %v1441 = vpop.f32.mrf.mxu0
  %v1442 = vpop.f32.mrf.mxu0
  %v1443 = vadd.f32 %v288, %v1442
  %v1444 = vpop.f32.mrf.mxu0
  %1445 = vmatprep.mubr.bf16.mxu0 0
  %1446 = vmatmul.mubr.bf16.gmra.mxu0 %v980
  %v1447 = vpop.f32.mrf.mxu0
  %v1448 = vadd.f32 %v288, %v1447
  %v1449 = vpop.f32.mrf.mxu0
  %v1450 = vpop.f32.mrf.mxu0
  %v1451 = vadd.f32 %v288, %v1450
  %v1452 = vpop.f32.mrf.mxu0
  %1453 = vmatprep.mubr.bf16.mxu0 0
  %1454 = vmatmul.mubr.bf16.gmra.mxu0 %v983
  %v1455 = vpop.f32.mrf.mxu0
  %v1456 = vadd.f32 %v288, %v1455
  %v1457 = vpop.f32.mrf.mxu0
  %v1458 = vpop.f32.mrf.mxu0
  %v1459 = vadd.f32 %v288, %v1458
  %v1460 = vpop.f32.mrf.mxu0
  %1461 = vmatprep.mubr.bf16.mxu0 0
  %1462 = vmatmul.mubr.bf16.gmra.mxu0 %v986
  %v1463 = vpop.f32.mrf.mxu0
  %v1464 = vadd.f32 %v288, %v1463
  %v1465 = vpop.f32.mrf.mxu0
  %v1466 = vpop.f32.mrf.mxu0
  %v1467 = vadd.f32 %v288, %v1466
  %v1468 = vpop.f32.mrf.mxu0
  %1469 = vmatprep.mubr.bf16.mxu0 0
  %1470 = vmatmul.mubr.bf16.gmra.mxu0 %v989
  %v1471 = vpop.f32.mrf.mxu0
  %v1472 = vadd.f32 %v288, %v1471
  %v1473 = vpop.f32.mrf.mxu0
  %v1474 = vpop.f32.mrf.mxu0
  %v1475 = vadd.f32 %v288, %v1474
  %v1476 = vpop.f32.mrf.mxu0
  %1477 = vmatprep.mubr.bf16.mxu0 0
  %1478 = vmatmul.mubr.bf16.gmra.mxu0 %v992
  %v1479 = vpop.f32.mrf.mxu0
  %v1480 = vadd.f32 %v288, %v1479
  %v1481 = vpop.f32.mrf.mxu0
  %v1482 = vpop.f32.mrf.mxu0
  %v1483 = vadd.f32 %v288, %v1482
  %v1484 = vpop.f32.mrf.mxu0
  %1485 = vmatprep.mubr.bf16.mxu0 0
  %1486 = vmatmul.mubr.bf16.gmra.mxu0 %v995
  %v1487 = vpop.f32.mrf.mxu0
  %v1488 = vadd.f32 %v288, %v1487
  %v1489 = vpop.f32.mrf.mxu0
  %v1490 = vpop.f32.mrf.mxu0
  %v1491 = vadd.f32 %v288, %v1490
  %v1492 = vpop.f32.mrf.mxu0
  %1493 = vmatprep.mubr.bf16.mxu0 0
  %1494 = vmatmul.mubr.bf16.gmra.mxu0 %v998
  %v1495 = vpop.f32.mrf.mxu0
  %v1496 = vadd.f32 %v288, %v1495
  %v1497 = vpop.f32.mrf.mxu0
  %v1498 = vpop.f32.mrf.mxu0
  %v1499 = vadd.f32 %v288, %v1498
  %v1500 = vpop.f32.mrf.mxu0
  %1501 = vmatprep.mubr.bf16.mxu0 0
  %1502 = vmatmul.mubr.bf16.gmra.mxu0 %v1001
  %v1503 = vpop.f32.mrf.mxu0
  %v1504 = vadd.f32 %v288, %v1503
  %v1505 = vpop.f32.mrf.mxu0
  %v1506 = vpop.f32.mrf.mxu0
  %v1507 = vadd.f32 %v288, %v1506
  %v1508 = vpop.f32.mrf.mxu0
  %1509 = vmatprep.mubr.bf16.mxu0 0
  %1510 = vmatmul.mubr.bf16.gmra.mxu0 %v1004
  %v1511 = vpop.f32.mrf.mxu0
  %v1512 = vadd.f32 %v288, %v1511
  %v1513 = vpop.f32.mrf.mxu0
  %v1514 = vpop.f32.mrf.mxu0
  %v1515 = vadd.f32 %v288, %v1514
  %v1516 = vpop.f32.mrf.mxu0
  %1517 = vmatprep.mubr.bf16.mxu0 0
  %1518 = vmatmul.mubr.bf16.gmra.mxu0 %v1007
  %v1519 = vpop.f32.mrf.mxu0
  %v1520 = vadd.f32 %v288, %v1519
  %v1521 = vpop.f32.mrf.mxu0
  %v1522 = vpop.f32.mrf.mxu0
  %v1523 = vadd.f32 %v288, %v1522
  %v1524 = vpop.f32.mrf.mxu0
  %1525 = vmatprep.mubr.bf16.mxu0 0
  %1526 = vmatmul.mubr.bf16.gmra.mxu0 %v1010
  %v1527 = vpop.f32.mrf.mxu0
  %v1528 = vadd.f32 %v288, %v1527
  %v1529 = vpop.f32.mrf.mxu0
  %v1530 = vpop.f32.mrf.mxu0
  %v1531 = vadd.f32 %v288, %v1530
  %v1532 = vpop.f32.mrf.mxu0
  %1533 = vmatprep.mubr.bf16.mxu0 0
  %1534 = vmatmul.mubr.bf16.gmra.mxu0 %v1013
  %v1535 = vpop.f32.mrf.mxu0
  %v1536 = vadd.f32 %v288, %v1535
  %v1537 = vpop.f32.mrf.mxu0
  %v1538 = vpop.f32.mrf.mxu0
  %v1539 = vadd.f32 %v288, %v1538
  %v1540 = vpop.f32.mrf.mxu0
  %1541 = vmatprep.mubr.bf16.mxu0 0
  %1542 = vmatmul.mubr.bf16.gmra.mxu0 %v1016
  %v1543 = vpop.f32.mrf.mxu0
  %v1544 = vadd.f32 %v288, %v1543
  %v1545 = vpop.f32.mrf.mxu0
  %v1546 = vpop.f32.mrf.mxu0
  %v1547 = vadd.f32 %v288, %v1546
  %v1548 = vpop.f32.mrf.mxu0
  %1549 = vmatprep.mubr.bf16.mxu0 0
  %1550 = vmatmul.mubr.bf16.gmra.mxu0 %v1019
  %v1551 = vpop.f32.mrf.mxu0
  %v1552 = vadd.f32 %v288, %v1551
  %v1553 = vpop.f32.mrf.mxu0
  %v1554 = vpop.f32.mrf.mxu0
  %v1555 = vadd.f32 %v288, %v1554
  %v1556 = vpop.f32.mrf.mxu0
  %1557 = vmatprep.mubr.bf16.mxu0 0
  %1558 = vmatmul.mubr.bf16.gmra.mxu0 %v1022
  %v1559 = vpop.f32.mrf.mxu0
  %v1560 = vadd.f32 %v288, %v1559
  %v1561 = vpop.f32.mrf.mxu0
  %v1562 = vpop.f32.mrf.mxu0
  %v1563 = vadd.f32 %v288, %v1562
  %v1564 = vpop.f32.mrf.mxu0
  %1565 = vmatprep.mubr.bf16.mxu0 0
  %1566 = vmatmul.mubr.bf16.gmra.mxu0 %v1025
  %v1567 = vpop.f32.mrf.mxu0
  %v1568 = vadd.f32 %v288, %v1567
  %v1569 = vpop.f32.mrf.mxu0
  %v1570 = vpop.f32.mrf.mxu0
  %v1571 = vadd.f32 %v288, %v1570
  %v1572 = vpop.f32.mrf.mxu0
  %1573 = vmatprep.mubr.bf16.mxu0 0
  %1574 = vmatmul.mubr.bf16.gmra.mxu0 %v1028
  %v1575 = vpop.f32.mrf.mxu0
  %v1576 = vadd.f32 %v288, %v1575
  %v1577 = vpop.f32.mrf.mxu0
  %v1578 = vpop.f32.mrf.mxu0
  %v1579 = vadd.f32 %v288, %v1578
  %v1580 = vpop.f32.mrf.mxu0
  %1581 = vmatprep.mubr.bf16.mxu0 0
  %1582 = vmatmul.mubr.bf16.gmra.mxu0 %v1031
  %v1583 = vpop.f32.mrf.mxu0
  %v1584 = vadd.f32 %v288, %v1583
  %v1585 = vpop.f32.mrf.mxu0
  %v1586 = vpop.f32.mrf.mxu0
  %v1587 = vadd.f32 %v288, %v1586
  %v1588 = vpop.f32.mrf.mxu0
  %1589 = vmatprep.mubr.bf16.mxu0 0
  %1590 = vmatmul.mubr.bf16.gmra.mxu0 %v1034
  %v1591 = vpop.f32.mrf.mxu0
  %v1592 = vadd.f32 %v288, %v1591
  %v1593 = vpop.f32.mrf.mxu0
  %v1594 = vpop.f32.mrf.mxu0
  %v1595 = vadd.f32 %v288, %v1594
  %v1596 = vpop.f32.mrf.mxu0
  %1597 = vmatprep.mubr.bf16.mxu0 0
  %1598 = vmatmul.mubr.bf16.gmra.mxu0 %v1037
  %v1599 = vpop.f32.mrf.mxu0
  %v1600 = vadd.f32 %v288, %v1599
  %v1601 = vpop.f32.mrf.mxu0
  %v1602 = vpop.f32.mrf.mxu0
  %v1603 = vadd.f32 %v288, %v1602
  %v1604 = vpop.f32.mrf.mxu0
  %1605 = vmatprep.mubr.bf16.mxu0 0
  %1606 = vmatmul.mubr.bf16.gmra.mxu0 %v1040
  %v1607 = vpop.f32.mrf.mxu0
  %v1608 = vadd.f32 %v288, %v1607
  %v1609 = vpop.f32.mrf.mxu0
  %v1610 = vpop.f32.mrf.mxu0
  %v1611 = vadd.f32 %v288, %v1610
  %v1612 = vpop.f32.mrf.mxu0
  %1613 = vmatprep.mubr.bf16.mxu0 0
  %1614 = vmatmul.mubr.bf16.gmra.mxu0 %v1043
  %v1615 = vpop.f32.mrf.mxu0
  %v1616 = vadd.f32 %v288, %v1615
  %v1617 = vpop.f32.mrf.mxu0
  %v1618 = vpop.f32.mrf.mxu0
  %v1619 = vadd.f32 %v288, %v1618
  %v1620 = vpop.f32.mrf.mxu0
  %1621 = vmatprep.mubr.bf16.mxu0 0
  %1622 = vmatmul.mubr.bf16.gmra.mxu0 %v1046
  %v1623 = vpop.f32.mrf.mxu0
  %v1624 = vadd.f32 %v288, %v1623
  %v1625 = vpop.f32.mrf.mxu0
  %v1626 = vpop.f32.mrf.mxu0
  %v1627 = vadd.f32 %v288, %v1626
  %v1628 = vpop.f32.mrf.mxu0
  %1629 = vmatprep.mubr.bf16.mxu0 0
  %1630 = vmatmul.mubr.bf16.gmra.mxu0 %v1049
  %v1631 = vpop.f32.mrf.mxu0
  %v1632 = vadd.f32 %v288, %v1631
  %v1633 = vpop.f32.mrf.mxu0
  %v1634 = vpop.f32.mrf.mxu0
  %v1635 = vadd.f32 %v288, %v1634
  %v1636 = vpop.f32.mrf.mxu0
  %1637 = vmatprep.mubr.bf16.mxu0 0
  %1638 = vmatmul.mubr.bf16.gmra.mxu0 %v1052
  %v1639 = vpop.f32.mrf.mxu0
  %v1640 = vadd.f32 %v288, %v1639
  %v1641 = vpop.f32.mrf.mxu0
  %v1642 = vpop.f32.mrf.mxu0
  %v1643 = vadd.f32 %v288, %v1642
  %v1644 = vpop.f32.mrf.mxu0
  %1645 = vmatprep.mubr.bf16.mxu0 0
  %1646 = vmatmul.mubr.bf16.gmra.mxu0 %v1055
  %v1647 = vpop.f32.mrf.mxu0
  %v1648 = vadd.f32 %v288, %v1647
  %v1649 = vpop.f32.mrf.mxu0
  %v1650 = vpop.f32.mrf.mxu0
  %v1651 = vadd.f32 %v288, %v1650
  %v1652 = vpop.f32.mrf.mxu0
  %1653 = vmatprep.mubr.bf16.mxu0 0
  %1654 = vmatmul.mubr.bf16.gmra.mxu0 %v1058
  %v1655 = vpop.f32.mrf.mxu0
  %v1656 = vadd.f32 %v288, %v1655
  %v1657 = vpop.f32.mrf.mxu0
  %v1658 = vpop.f32.mrf.mxu0
  %v1659 = vadd.f32 %v288, %v1658
  %v1660 = vpop.f32.mrf.mxu0
  %1661 = vmatprep.mubr.bf16.mxu0 0
  %1662 = vmatmul.mubr.bf16.gmra.mxu0 %v1061
  %v1663 = vpop.f32.mrf.mxu0
  %v1664 = vadd.f32 %v288, %v1663
  %v1665 = vpop.f32.mrf.mxu0
  %v1666 = vpop.f32.mrf.mxu0
  %v1667 = vadd.f32 %v288, %v1666
  %v1668 = vpop.f32.mrf.mxu0
  %1669 = vmatprep.mubr.bf16.mxu0 0
  %1670 = vmatmul.mubr.bf16.gmra.mxu0 %v1064
  %v1671 = vpop.f32.mrf.mxu0
  %v1672 = vadd.f32 %v288, %v1671
  %v1673 = vpop.f32.mrf.mxu0
  %v1674 = vpop.f32.mrf.mxu0
  %v1675 = vadd.f32 %v288, %v1674
  %v1676 = vpop.f32.mrf.mxu0
  %1677 = vmatprep.mubr.bf16.mxu0 0
  %1678 = vmatmul.mubr.bf16.gmra.mxu0 %v1067
  %v1679 = vpop.f32.mrf.mxu0
  %v1680 = vadd.f32 %v288, %v1679
  %v1681 = vpop.f32.mrf.mxu0
  %v1682 = vpop.f32.mrf.mxu0
  %v1683 = vadd.f32 %v288, %v1682
  %v1684 = vpop.f32.mrf.mxu0
  %1685 = vmatprep.mubr.bf16.mxu0 0
  %1686 = vmatmul.mubr.bf16.gmra.mxu0 %v1070
  %v1687 = vpop.f32.mrf.mxu0
  %v1688 = vadd.f32 %v288, %v1687
  %v1689 = vpop.f32.mrf.mxu0
  %v1690 = vpop.f32.mrf.mxu0
  %v1691 = vadd.f32 %v288, %v1690
  %v1692 = vpop.f32.mrf.mxu0
  %1693 = vmatprep.mubr.bf16.mxu0 0
  %1694 = vmatmul.mubr.bf16.gmra.mxu0 %v1073
  %v1695 = vpop.f32.mrf.mxu0
  %v1696 = vadd.f32 %v288, %v1695
  %v1697 = vpop.f32.mrf.mxu0
  %v1698 = vpop.f32.mrf.mxu0
  %v1699 = vadd.f32 %v288, %v1698
  %v1700 = vpop.f32.mrf.mxu0
  %1701 = vmatprep.mubr.bf16.mxu0 0
  %1702 = vmatmul.mubr.bf16.gmra.mxu0 %v1076
  %v1703 = vpop.f32.mrf.mxu0
  %v1704 = vadd.f32 %v288, %v1703
  %v1705 = vpop.f32.mrf.mxu0
  %v1706 = vpop.f32.mrf.mxu0
  %v1707 = vadd.f32 %v288, %v1706
  %v1708 = vpop.f32.mrf.mxu0
  %1709 = vmatprep.mubr.bf16.mxu0 0
  %1710 = vmatmul.mubr.bf16.gmra.mxu0 %v1079
  %v1711 = vpop.f32.mrf.mxu0
  %v1712 = vadd.f32 %v288, %v1711
  %v1713 = vpop.f32.mrf.mxu0
  %v1714 = vpop.f32.mrf.mxu0
  %v1715 = vadd.f32 %v288, %v1714
  %v1716 = vpop.f32.mrf.mxu0
  %1717 = vmatprep.mubr.bf16.mxu0 0
  %1718 = vmatmul.mubr.bf16.gmra.mxu0 %v1082
  %v1719 = vpop.f32.mrf.mxu0
  %v1720 = vadd.f32 %v288, %v1719
  %v1721 = vpop.f32.mrf.mxu0
  %v1722 = vpop.f32.mrf.mxu0
  %v1723 = vadd.f32 %v288, %v1722
  %v1724 = vpop.f32.mrf.mxu0
  %1725 = vmatprep.mubr.bf16.mxu0 0
  %1726 = vmatmul.mubr.bf16.gmra.mxu0 %v1085
  %v1727 = vpop.f32.mrf.mxu0
  %v1728 = vadd.f32 %v288, %v1727
  %v1729 = vpop.f32.mrf.mxu0
  %v1730 = vpop.f32.mrf.mxu0
  %v1731 = vadd.f32 %v288, %v1730
  %v1732 = vpop.f32.mrf.mxu0
  %1733 = vmatprep.mubr.bf16.mxu0 0
  %1734 = vmatmul.mubr.bf16.gmra.mxu0 %v1088
  %v1735 = vpop.f32.mrf.mxu0
  %v1736 = vadd.f32 %v288, %v1735
  %v1737 = vpop.f32.mrf.mxu0
  %v1738 = vpop.f32.mrf.mxu0
  %v1739 = vadd.f32 %v288, %v1738
  %v1740 = vpop.f32.mrf.mxu0
  %1741 = vmatprep.mubr.bf16.mxu0 0
  %1742 = vmatmul.mubr.bf16.gmra.mxu0 %v1091
  %v1743 = vpop.f32.mrf.mxu0
  %v1744 = vadd.f32 %v288, %v1743
  %v1745 = vpop.f32.mrf.mxu0
  %v1746 = vpop.f32.mrf.mxu0
  %v1747 = vadd.f32 %v288, %v1746
  %v1748 = vpop.f32.mrf.mxu0
  %1749 = vmatprep.mubr.bf16.mxu0 0
  %1750 = vmatmul.mubr.bf16.gmra.mxu0 %v1094
  %v1751 = vpop.f32.mrf.mxu0
  %v1752 = vadd.f32 %v288, %v1751
  %v1753 = vpop.f32.mrf.mxu0
  %v1754 = vpop.f32.mrf.mxu0
  %v1755 = vadd.f32 %v288, %v1754
  %v1756 = vpop.f32.mrf.mxu0
  %1757 = vmatprep.mubr.bf16.mxu0 0
  %1758 = vmatmul.mubr.bf16.gmra.mxu0 %v1097
  %v1759 = vpop.f32.mrf.mxu0
  %v1760 = vadd.f32 %v288, %v1759
  %v1761 = vpop.f32.mrf.mxu0
  %v1762 = vpop.f32.mrf.mxu0
  %v1763 = vadd.f32 %v288, %v1762
  %v1764 = vpop.f32.mrf.mxu0
  %1765 = vmatprep.mubr.bf16.mxu0 0
  %1766 = vmatmul.mubr.bf16.gmra.mxu0 %v1100
  %v1767 = vpop.f32.mrf.mxu0
  %v1768 = vadd.f32 %v288, %v1767
  %v1769 = vpop.f32.mrf.mxu0
  %v1770 = vpop.f32.mrf.mxu0
  %v1771 = vadd.f32 %v288, %v1770
  %v1772 = vpop.f32.mrf.mxu0
  %1773 = vmatprep.mubr.bf16.mxu0 0
  %1774 = vmatmul.mubr.bf16.gmra.mxu0 %v1103
  %v1775 = vpop.f32.mrf.mxu0
  %v1776 = vadd.f32 %v288, %v1775
  %v1777 = vpop.f32.mrf.mxu0
  %v1778 = vpop.f32.mrf.mxu0
  %v1779 = vadd.f32 %v288, %v1778
  %v1780 = vpop.f32.mrf.mxu0
  %1781 = vmatprep.mubr.bf16.mxu0 0
  %1782 = vmatmul.mubr.bf16.gmra.mxu0 %v1106
  %v1783 = vpop.f32.mrf.mxu0
  %v1784 = vadd.f32 %v288, %v1783
  %v1785 = vpop.f32.mrf.mxu0
  %v1786 = vpop.f32.mrf.mxu0
  %v1787 = vadd.f32 %v288, %v1786
  %v1788 = vpop.f32.mrf.mxu0
  %1789 = vmatprep.mubr.bf16.mxu0 0
  %1790 = vmatmul.mubr.bf16.gmra.mxu0 %v1109
  %v1791 = vpop.f32.mrf.mxu0
  %v1792 = vadd.f32 %v288, %v1791
  %v1793 = vpop.f32.mrf.mxu0
  %v1794 = vpop.f32.mrf.mxu0
  %v1795 = vadd.f32 %v288, %v1794
  %v1796 = vpop.f32.mrf.mxu0
  %1797 = vmatprep.mubr.bf16.mxu0 0
  %1798 = vmatmul.mubr.bf16.gmra.mxu0 %v1112
  %v1799 = vpop.f32.mrf.mxu0
  %v1800 = vadd.f32 %v288, %v1799
  %v1801 = vpop.f32.mrf.mxu0
  %v1802 = vpop.f32.mrf.mxu0
  %v1803 = vadd.f32 %v288, %v1802
  %v1804 = vpop.f32.mrf.mxu0
  %1805 = vmatprep.mubr.bf16.mxu0 0
  %1806 = vmatmul.mubr.bf16.gmra.mxu0 %v1115
  %v1807 = vpop.f32.mrf.mxu0
  %v1808 = vadd.f32 %v288, %v1807
  %v1809 = vpop.f32.mrf.mxu0
  %v1810 = vpop.f32.mrf.mxu0
  %v1811 = vadd.f32 %v288, %v1810
  %v1812 = vpop.f32.mrf.mxu0
  %1813 = vmatprep.mubr.bf16.mxu0 0
  %1814 = vmatmul.mubr.bf16.gmra.mxu0 %v1118
  %v1815 = vpop.f32.mrf.mxu0
  %v1816 = vadd.f32 %v288, %v1815
  %v1817 = vpop.f32.mrf.mxu0
  %v1818 = vpop.f32.mrf.mxu0
  %v1819 = vadd.f32 %v288, %v1818
  %v1820 = vpop.f32.mrf.mxu0
  %1821 = vmatprep.mubr.bf16.mxu0 0
  %1822 = vmatmul.mubr.bf16.gmra.mxu0 %v1121
  %v1823 = vpop.f32.mrf.mxu0
  %v1824 = vadd.f32 %v288, %v1823
  %v1825 = vpop.f32.mrf.mxu0
  %v1826 = vpop.f32.mrf.mxu0
  %v1827 = vadd.f32 %v288, %v1826
  %v1828 = vpop.f32.mrf.mxu0
  %1829 = vmatprep.mubr.bf16.mxu0 0
  %1830 = vmatmul.mubr.bf16.gmra.mxu0 %v1124
  %v1831 = vpop.f32.mrf.mxu0
  %v1832 = vadd.f32 %v288, %v1831
  %v1833 = vpop.f32.mrf.mxu0
  %v1834 = vpop.f32.mrf.mxu0
  %v1835 = vadd.f32 %v288, %v1834
  %v1836 = vpop.f32.mrf.mxu0
  %1837 = vmatprep.mubr.bf16.mxu0 0
  %1838 = vmatmul.mubr.bf16.gmra.mxu0 %v1127
  %v1839 = vpop.f32.mrf.mxu0
  %v1840 = vadd.f32 %v288, %v1839
  %v1841 = vpop.f32.mrf.mxu0
  %v1842 = vpop.f32.mrf.mxu0
  %v1843 = vadd.f32 %v288, %v1842
  %v1844 = vpop.f32.mrf.mxu0
  %1845 = vmatprep.mubr.bf16.mxu0 0
  %1846 = vmatmul.mubr.bf16.gmra.mxu0 %v1130
  %v1847 = vpop.f32.mrf.mxu0
  %v1848 = vadd.f32 %v288, %v1847
  %v1849 = vpop.f32.mrf.mxu0
  %v1850 = vpop.f32.mrf.mxu0
  %v1851 = vadd.f32 %v288, %v1850
  %v1852 = vpop.f32.mrf.mxu0
  %1853 = vmatprep.mubr.bf16.mxu0 0
  %1854 = vmatmul.mubr.bf16.gmra.mxu0 %v1133
  %v1855 = vpop.f32.mrf.mxu0
  %v1856 = vadd.f32 %v288, %v1855
  %v1857 = vpop.f32.mrf.mxu0
  %v1858 = vpop.f32.mrf.mxu0
  %v1859 = vadd.f32 %v288, %v1858
  %v1860 = vpop.f32.mrf.mxu0
  %1861 = vmatprep.mubr.bf16.mxu0 0
  %1862 = vmatmul.mubr.bf16.gmra.mxu0 %v1136
  %v1863 = vpop.f32.mrf.mxu0
  %v1864 = vadd.f32 %v288, %v1863
  %v1865 = vpop.f32.mrf.mxu0
  %v1866 = vpop.f32.mrf.mxu0
  %v1867 = vadd.f32 %v288, %v1866
  %v1868 = vpop.f32.mrf.mxu0
  %1869 = vmatprep.mubr.bf16.mxu0 0
  %1870 = vmatmul.mubr.bf16.gmra.mxu0 %v1139
  %v1871 = vpop.f32.mrf.mxu0
  %v1872 = vadd.f32 %v288, %v1871
  %v1873 = vpop.f32.mrf.mxu0
  %v1874 = vpop.f32.mrf.mxu0
  %v1875 = vadd.f32 %v288, %v1874
  %v1876 = vpop.f32.mrf.mxu0
  %1877 = vmatprep.mubr.bf16.mxu0 0
  %1878 = vmatmul.mubr.bf16.gmra.mxu0 %v1142
  %v1879 = vpop.f32.mrf.mxu0
  %v1880 = vadd.f32 %v288, %v1879
  %v1881 = vpop.f32.mrf.mxu0
  %v1882 = vpop.f32.mrf.mxu0
  %v1883 = vadd.f32 %v288, %v1882
  %v1884 = vpop.f32.mrf.mxu0
  %1885 = vmatprep.mubr.bf16.mxu0 0
  %1886 = vmatmul.mubr.bf16.gmra.mxu0 %v1145
  %v1887 = vpop.f32.mrf.mxu0
  %v1888 = vadd.f32 %v288, %v1887
  %v1889 = vpop.f32.mrf.mxu0
  %v1890 = vpop.f32.mrf.mxu0
  %v1891 = vadd.f32 %v288, %v1890
  %v1892 = vpop.f32.mrf.mxu0
  %1893 = vmatprep.mubr.bf16.mxu0 0
  %1894 = vmatmul.mubr.bf16.gmra.mxu0 %v1148
  %v1895 = vpop.f32.mrf.mxu0
  %v1896 = vadd.f32 %v288, %v1895
  %v1897 = vpop.f32.mrf.mxu0
  %v1898 = vpop.f32.mrf.mxu0
  %v1899 = vadd.f32 %v288, %v1898
  %v1900 = vpop.f32.mrf.mxu0
  %1901 = vmatprep.mubr.bf16.mxu0 0
  %1902 = vmatmul.mubr.bf16.gmra.mxu0 %v1151
  %v1903 = vpop.f32.mrf.mxu0
  %v1904 = vadd.f32 %v288, %v1903
  %v1905 = vpop.f32.mrf.mxu0
  %v1906 = vpop.f32.mrf.mxu0
  %v1907 = vadd.f32 %v288, %v1906
  %v1908 = vpop.f32.mrf.mxu0
  %1909 = vmatprep.mubr.bf16.mxu0 0
  %1910 = vmatmul.mubr.bf16.gmra.mxu0 %v1154
  %v1911 = vpop.f32.mrf.mxu0
  %v1912 = vadd.f32 %v288, %v1911
  %v1913 = vpop.f32.mrf.mxu0
  %v1914 = vpop.f32.mrf.mxu0
  %v1915 = vadd.f32 %v288, %v1914
  %v1916 = vpop.f32.mrf.mxu0
  %1917 = vmatprep.mubr.bf16.mxu0 0
  %1918 = vmatmul.mubr.bf16.gmra.mxu0 %v1157
  %v1919 = vpop.f32.mrf.mxu0
  %v1920 = vadd.f32 %v288, %v1919
  %v1921 = vpop.f32.mrf.mxu0
  %v1922 = vpop.f32.mrf.mxu0
  %v1923 = vadd.f32 %v288, %v1922
  %v1924 = vpop.f32.mrf.mxu0
  %1925 = vmatprep.mubr.bf16.mxu0 0
  %1926 = vmatmul.mubr.bf16.gmra.mxu0 %v1160
  %v1927 = vpop.f32.mrf.mxu0
  %v1928 = vadd.f32 %v288, %v1927
  %v1929 = vpop.f32.mrf.mxu0
  %v1930 = vpop.f32.mrf.mxu0
  %v1931 = vadd.f32 %v288, %v1930
  %v1932 = vpop.f32.mrf.mxu0
  %1933 = vmatprep.mubr.bf16.mxu0 0
  %1934 = vmatmul.mubr.bf16.gmra.mxu0 %v1163
  %v1935 = vpop.f32.mrf.mxu0
  %v1936 = vadd.f32 %v288, %v1935
  %v1937 = vpop.f32.mrf.mxu0
  %v1938 = vpop.f32.mrf.mxu0
  %v1939 = vadd.f32 %v288, %v1938
  %v1940 = vpop.f32.mrf.mxu0
  %1941 = vmatprep.mubr.bf16.mxu0 0
  %1942 = vmatmul.mubr.bf16.gmra.mxu0 %v1166
  %v1943 = vpop.f32.mrf.mxu0
  %v1944 = vadd.f32 %v288, %v1943
  %v1945 = vpop.f32.mrf.mxu0
  %v1946 = vpop.f32.mrf.mxu0
  %v1947 = vadd.f32 %v288, %v1946
  %v1948 = vpop.f32.mrf.mxu0
  %1949 = vmatprep.mubr.bf16.mxu0 0
  %1950 = vmatmul.mubr.bf16.gmra.mxu0 %v1169
  %v1951 = vpop.f32.mrf.mxu0
  %v1952 = vadd.f32 %v288, %v1951
  %v1953 = vpop.f32.mrf.mxu0
  %v1954 = vpop.f32.mrf.mxu0
  %v1955 = vadd.f32 %v288, %v1954
  %v1956 = vpop.f32.mrf.mxu0
  %1957 = vmatprep.mubr.bf16.mxu0 0
  %1958 = vmatmul.mubr.bf16.gmra.mxu0 %v1172
  %v1959 = vpop.f32.mrf.mxu0
  %v1960 = vadd.f32 %v288, %v1959
  %v1961 = vpop.f32.mrf.mxu0
  %v1962 = vpop.f32.mrf.mxu0
  %v1963 = vadd.f32 %v288, %v1962
  %v1964 = vpop.f32.mrf.mxu0
  %1965 = vmatprep.mubr.bf16.mxu0 0
  %1966 = vmatmul.mubr.bf16.gmra.mxu0 %v1175
  %v1967 = vpop.f32.mrf.mxu0
  %v1968 = vadd.f32 %v288, %v1967
  %v1969 = vpop.f32.mrf.mxu0
  %v1970 = vpop.f32.mrf.mxu0
  %v1971 = vadd.f32 %v288, %v1970
  %v1972 = vpop.f32.mrf.mxu0
  %1973 = vmatprep.mubr.bf16.mxu0 0
  %1974 = vmatmul.mubr.bf16.gmra.mxu0 %v1178
  %v1975 = vpop.f32.mrf.mxu0
  %v1976 = vadd.f32 %v288, %v1975
  %v1977 = vpop.f32.mrf.mxu0
  %v1978 = vpop.f32.mrf.mxu0
  %v1979 = vadd.f32 %v288, %v1978
  %v1980 = vpop.f32.mrf.mxu0
  %1981 = vmatprep.mubr.bf16.mxu0 0
  %1982 = vmatmul.mubr.bf16.gmra.mxu0 %v1181
  %v1983 = vpop.f32.mrf.mxu0
  %v1984 = vadd.f32 %v288, %v1983
  %v1985 = vpop.f32.mrf.mxu0
  %v1986 = vpop.f32.mrf.mxu0
  %v1987 = vadd.f32 %v288, %v1986
  %v1988 = vpop.f32.mrf.mxu0
  %1989 = vmatprep.mubr.bf16.mxu0 0
  %1990 = vmatmul.mubr.bf16.gmra.mxu0 %v1184
  %v1991 = vpop.f32.mrf.mxu0
  %v1992 = vadd.f32 %v288, %v1991
  %v1993 = vpop.f32.mrf.mxu0
  %v1994 = vpop.f32.mrf.mxu0
  %v1995 = vadd.f32 %v288, %v1994
  %v1996 = vpop.f32.mrf.mxu0
  %1997 = vmatprep.mubr.bf16.mxu0 0
  %1998 = vmatmul.mubr.bf16.gmra.mxu0 %v1187
  %v1999 = vpop.f32.mrf.mxu0
  %v2000 = vadd.f32 %v288, %v1999
  %v2001 = vpop.f32.mrf.mxu0
  %v2002 = vpop.f32.mrf.mxu0
  %v2003 = vadd.f32 %v288, %v2002
  %v2004 = vpop.f32.mrf.mxu0
  %2005 = vmatprep.mubr.bf16.mxu0 0
  %2006 = vmatmul.mubr.bf16.gmra.mxu0 %v1190
  %v2007 = vpop.f32.mrf.mxu0
  %v2008 = vadd.f32 %v288, %v2007
  %v2009 = vpop.f32.mrf.mxu0
  %v2010 = vpop.f32.mrf.mxu0
  %v2011 = vadd.f32 %v288, %v2010
  %v2012 = vpop.f32.mrf.mxu0
  %2013 = vmatprep.mubr.bf16.mxu0 0
  %2014 = vmatmul.mubr.bf16.gmra.mxu0 %v1193
  %v2015 = vpop.f32.mrf.mxu0
  %v2016 = vadd.f32 %v288, %v2015
  %v2017 = vpop.f32.mrf.mxu0
  %v2018 = vpop.f32.mrf.mxu0
  %v2019 = vadd.f32 %v288, %v2018
  %v2020 = vpop.f32.mrf.mxu0
  %2021 = vmatprep.mubr.bf16.mxu0 0
  %2022 = vmatmul.mubr.bf16.gmra.mxu0 %v1196
  %v2023 = vpop.f32.mrf.mxu0
  %v2024 = vadd.f32 %v288, %v2023
  %v2025 = vpop.f32.mrf.mxu0
  %v2026 = vpop.f32.mrf.mxu0
  %v2027 = vadd.f32 %v288, %v2026
  %v2028 = vpop.f32.mrf.mxu0
  %2029 = vmatprep.mubr.bf16.mxu0 0
  %2030 = vmatmul.mubr.bf16.gmra.mxu0 %v1199
  %v2031 = vpop.f32.mrf.mxu0
  %v2032 = vadd.f32 %v288, %v2031
  %v2033 = vpop.f32.mrf.mxu0
  %v2034 = vpop.f32.mrf.mxu0
  %v2035 = vadd.f32 %v288, %v2034
  %v2036 = vpop.f32.mrf.mxu0
  %2037 = vmatprep.mubr.bf16.mxu0 0
  %2038 = vmatmul.mubr.bf16.gmra.mxu0 %v1202
  %v2039 = vpop.f32.mrf.mxu0
  %v2040 = vadd.f32 %v288, %v2039
  %v2041 = vpop.f32.mrf.mxu0
  %v2042 = vpop.f32.mrf.mxu0
  %v2043 = vadd.f32 %v288, %v2042
  %v2044 = vpop.f32.mrf.mxu0
  %2045 = vmatprep.mubr.bf16.mxu0 0
  %2046 = vmatmul.mubr.bf16.gmra.mxu0 %v1205
  %v2047 = vpop.f32.mrf.mxu0
  %v2048 = vadd.f32 %v288, %v2047
  %v2049 = vpop.f32.mrf.mxu0
  %v2050 = vpop.f32.mrf.mxu0
  %v2051 = vadd.f32 %v288, %v2050
  %v2052 = vpop.f32.mrf.mxu0
  %2053 = vmatprep.mubr.bf16.mxu0 0
  %2054 = vmatmul.mubr.bf16.gmra.mxu0 %v1208
  %v2055 = vpop.f32.mrf.mxu0
  %v2056 = vadd.f32 %v288, %v2055
  %v2057 = vpop.f32.mrf.mxu0
  %v2058 = vpop.f32.mrf.mxu0
  %v2059 = vadd.f32 %v288, %v2058
  %v2060 = vpop.f32.mrf.mxu0
  %2061 = vmatprep.mubr.bf16.mxu0 0
  %2062 = vmatmul.mubr.bf16.gmra.mxu0 %v1211
  %v2063 = vpop.f32.mrf.mxu0
  %v2064 = vadd.f32 %v288, %v2063
  %v2065 = vpop.f32.mrf.mxu0
  %v2066 = vpop.f32.mrf.mxu0
  %v2067 = vadd.f32 %v288, %v2066
  %v2068 = vpop.f32.mrf.mxu0
  %2069 = vmatprep.mubr.bf16.mxu0 0
  %2070 = vmatmul.mubr.bf16.gmra.mxu0 %v1214
  %v2071 = vpop.f32.mrf.mxu0
  %v2072 = vadd.f32 %v288, %v2071
  %v2073 = vpop.f32.mrf.mxu0
  %v2074 = vpop.f32.mrf.mxu0
  %v2075 = vadd.f32 %v288, %v2074
  %v2076 = vpop.f32.mrf.mxu0
  %2077 = vmatprep.mubr.bf16.mxu0 0
  %2078 = vmatmul.mubr.bf16.gmra.mxu0 %v1217
  %v2079 = vpop.f32.mrf.mxu0
  %v2080 = vadd.f32 %v288, %v2079
  %v2081 = vpop.f32.mrf.mxu0
  %v2082 = vpop.f32.mrf.mxu0
  %v2083 = vadd.f32 %v288, %v2082
  %v2084 = vpop.f32.mrf.mxu0
  %2085 = vmatprep.mubr.bf16.mxu0 0
  %2086 = vmatmul.mubr.bf16.gmra.mxu0 %v1220
  %v2087 = vpop.f32.mrf.mxu0
  %v2088 = vadd.f32 %v288, %v2087
  %v2089 = vpop.f32.mrf.mxu0
  %v2090 = vpop.f32.mrf.mxu0
  %v2091 = vadd.f32 %v288, %v2090
  %v2092 = vpop.f32.mrf.mxu0
  %2093 = vmatprep.mubr.bf16.mxu0 0
  %2094 = vmatmul.mubr.bf16.gmra.mxu0 %v1223
  %v2095 = vpop.f32.mrf.mxu0
  %v2096 = vadd.f32 %v288, %v2095
  %v2097 = vpop.f32.mrf.mxu0
  %v2098 = vpop.f32.mrf.mxu0
  %v2099 = vadd.f32 %v288, %v2098
  %v2100 = vpop.f32.mrf.mxu0
  %2101 = vmatprep.mubr.bf16.mxu0 0
  %2102 = vmatmul.mubr.bf16.gmra.mxu0 %v1226
  %v2103 = vpop.f32.mrf.mxu0
  %v2104 = vadd.f32 %v288, %v2103
  %v2105 = vpop.f32.mrf.mxu0
  %v2106 = vpop.f32.mrf.mxu0
  %v2107 = vadd.f32 %v288, %v2106
  %v2108 = vpop.f32.mrf.mxu0
  %2109 = vmatprep.mubr.bf16.mxu0 0
  %2110 = vmatmul.mubr.bf16.gmra.mxu0 %v1229
  %v2111 = vpop.f32.mrf.mxu0
  %v2112 = vadd.f32 %v288, %v2111
  %v2113 = vpop.f32.mrf.mxu0
  %v2114 = vpop.f32.mrf.mxu0
  %v2115 = vadd.f32 %v288, %v2114
  %v2116 = vpop.f32.mrf.mxu0
  %2117 = vmatprep.mubr.bf16.mxu0 0
  %2118 = vmatmul.mubr.bf16.gmra.mxu0 %v1232
  %v2119 = vpop.f32.mrf.mxu0
  %v2120 = vadd.f32 %v288, %v2119
  %v2121 = vpop.f32.mrf.mxu0
  %v2122 = vpop.f32.mrf.mxu0
  %v2123 = vadd.f32 %v288, %v2122
  %v2124 = vpop.f32.mrf.mxu0
  %2125 = vmatprep.mubr.bf16.mxu0 0
  %2126 = vmatmul.mubr.bf16.gmra.mxu0 %v1235
  %v2127 = vpop.f32.mrf.mxu0
  %v2128 = vadd.f32 %v288, %v2127
  %v2129 = vpop.f32.mrf.mxu0
  %v2130 = vpop.f32.mrf.mxu0
  %v2131 = vadd.f32 %v288, %v2130
  %v2132 = vpop.f32.mrf.mxu0
  %2133 = vmatprep.mubr.bf16.mxu0 0
  %2134 = vmatmul.mubr.bf16.gmra.mxu0 %v1238
  %v2135 = vpop.f32.mrf.mxu0
  %v2136 = vadd.f32 %v288, %v2135
  %v2137 = vpop.f32.mrf.mxu0
  %v2138 = vpop.f32.mrf.mxu0
  %v2139 = vadd.f32 %v288, %v2138
  %v2140 = vpop.f32.mrf.mxu0
  %2141 = vmatprep.mubr.bf16.mxu0 0
  %2142 = vmatmul.mubr.bf16.gmra.mxu0 %v1241
  %v2143 = vpop.f32.mrf.mxu0
  %v2144 = vadd.f32 %v288, %v2143
  %v2145 = vpop.f32.mrf.mxu0
  %v2146 = vpop.f32.mrf.mxu0
  %v2147 = vadd.f32 %v288, %v2146
  %v2148 = vpop.f32.mrf.mxu0
  %2149 = vmatprep.mubr.bf16.mxu0 0
  %2150 = vmatmul.mubr.bf16.gmra.mxu0 %v1244
  %v2151 = vpop.f32.mrf.mxu0
  %v2152 = vadd.f32 %v288, %v2151
  %v2153 = vpop.f32.mrf.mxu0
  %v2154 = vpop.f32.mrf.mxu0
  %v2155 = vadd.f32 %v288, %v2154
  %v2156 = vpop.f32.mrf.mxu0
  %2157 = vmatprep.mubr.bf16.mxu0 0
  %2158 = vmatmul.mubr.bf16.gmra.mxu0 %v1247
  %v2159 = vpop.f32.mrf.mxu0
  %v2160 = vadd.f32 %v288, %v2159
  %v2161 = vpop.f32.mrf.mxu0
  %v2162 = vpop.f32.mrf.mxu0
  %v2163 = vadd.f32 %v288, %v2162
  %v2164 = vpop.f32.mrf.mxu0
  %2165 = vmatprep.mubr.bf16.mxu0 0
  %2166 = vmatmul.mubr.bf16.gmra.mxu0 %v1250
  %v2167 = vpop.f32.mrf.mxu0
  %v2168 = vadd.f32 %v288, %v2167
  %v2169 = vpop.f32.mrf.mxu0
  %v2170 = vpop.f32.mrf.mxu0
  %v2171 = vadd.f32 %v288, %v2170
  %v2172 = vpop.f32.mrf.mxu0
  %2173 = vmatprep.mubr.bf16.mxu0 0
  %2174 = vmatmul.mubr.bf16.gmra.mxu0 %v1253
  %v2175 = vpop.f32.mrf.mxu0
  %v2176 = vadd.f32 %v288, %v2175
  %v2177 = vpop.f32.mrf.mxu0
  %v2178 = vpop.f32.mrf.mxu0
  %v2179 = vadd.f32 %v288, %v2178
  %v2180 = vpop.f32.mrf.mxu0
  %2181 = vmatprep.mubr.bf16.mxu0 0
  %2182 = vmatmul.mubr.bf16.gmra.mxu0 %v1256
  %v2183 = vpop.f32.mrf.mxu0
  %v2184 = vadd.f32 %v288, %v2183
  %v2185 = vpop.f32.mrf.mxu0
  %v2186 = vpop.f32.mrf.mxu0
  %v2187 = vadd.f32 %v288, %v2186
  %v2188 = vpop.f32.mrf.mxu0
  %2189 = vmatprep.mubr.bf16.mxu0 0
  %2190 = vmatmul.mubr.bf16.gmra.mxu0 %v1259
  %v2191 = vpop.f32.mrf.mxu0
  %v2192 = vadd.f32 %v288, %v2191
  %v2193 = vpop.f32.mrf.mxu0
  %v2194 = vpop.f32.mrf.mxu0
  %v2195 = vadd.f32 %v288, %v2194
  %v2196 = vpop.f32.mrf.mxu0
  %2197 = vmatprep.mubr.bf16.mxu0 0
  %2198 = vmatmul.mubr.bf16.gmra.mxu0 %v1262
  %v2199 = vpop.f32.mrf.mxu0
  %v2200 = vadd.f32 %v288, %v2199
  %v2201 = vpop.f32.mrf.mxu0
  %v2202 = vpop.f32.mrf.mxu0
  %v2203 = vadd.f32 %v288, %v2202
  %v2204 = vpop.f32.mrf.mxu0
  %2205 = vmatprep.mubr.bf16.mxu0 0
  %2206 = vmatmul.mubr.bf16.gmra.mxu0 %v1265
  %v2207 = vpop.f32.mrf.mxu0
  %v2208 = vadd.f32 %v288, %v2207
  %v2209 = vpop.f32.mrf.mxu0
  %v2210 = vpop.f32.mrf.mxu0
  %v2211 = vadd.f32 %v288, %v2210
  %v2212 = vpop.f32.mrf.mxu0
  %2213 = vmatprep.mubr.bf16.mxu0 0
  %2214 = vmatmul.mubr.bf16.gmra.mxu0 %v1268
  %v2215 = vpop.f32.mrf.mxu0
  %v2216 = vadd.f32 %v288, %v2215
  %v2217 = vpop.f32.mrf.mxu0
  %v2218 = vpop.f32.mrf.mxu0
  %v2219 = vadd.f32 %v288, %v2218
  %v2220 = vpop.f32.mrf.mxu0
  %2221 = vmatprep.mubr.bf16.mxu0 0
  %2222 = vmatmul.mubr.bf16.gmra.mxu0 %v1271
  %v2223 = vpop.f32.mrf.mxu0
  %v2224 = vadd.f32 %v288, %v2223
  %v2225 = vpop.f32.mrf.mxu0
  %v2226 = vpop.f32.mrf.mxu0
  %v2227 = vadd.f32 %v288, %v2226
  %v2228 = vpop.f32.mrf.mxu0
  %2229 = vmatprep.mubr.bf16.mxu0 0
  %2230 = vmatmul.mubr.bf16.gmra.mxu0 %v1274
  %v2231 = vpop.f32.mrf.mxu0
  %v2232 = vadd.f32 %v288, %v2231
  %v2233 = vpop.f32.mrf.mxu0
  %v2234 = vpop.f32.mrf.mxu0
  %v2235 = vadd.f32 %v288, %v2234
  %v2236 = vpop.f32.mrf.mxu0
  %2237 = vmatprep.mubr.bf16.mxu0 0
  %2238 = vmatmul.mubr.bf16.gmra.mxu0 %v1277
  %v2239 = vpop.f32.mrf.mxu0
  %v2240 = vadd.f32 %v288, %v2239
  %v2241 = vpop.f32.mrf.mxu0
  %v2242 = vpop.f32.mrf.mxu0
  %v2243 = vadd.f32 %v288, %v2242
  %v2244 = vpop.f32.mrf.mxu0
  %2245 = vmatprep.mubr.bf16.mxu0 0
  %2246 = vmatmul.mubr.bf16.gmra.mxu0 %v1280
  %v2247 = vpop.f32.mrf.mxu0
  %v2248 = vadd.f32 %v288, %v2247
  %v2249 = vpop.f32.mrf.mxu0
  %v2250 = vpop.f32.mrf.mxu0
  %v2251 = vadd.f32 %v288, %v2250
  %v2252 = vpop.f32.mrf.mxu0
  %2253 = vmatprep.mubr.bf16.mxu0 0
  %2254 = vmatmul.mubr.bf16.gmra.mxu0 %v1283
  %v2255 = vpop.f32.mrf.mxu0
  %v2256 = vadd.f32 %v288, %v2255
  %v2257 = vpop.f32.mrf.mxu0
  %v2258 = vpop.f32.mrf.mxu0
  %v2259 = vadd.f32 %v288, %v2258
  %v2260 = vpop.f32.mrf.mxu0
  %2261 = vmatprep.mubr.bf16.mxu0 0
  %2262 = vmatmul.mubr.bf16.gmra.mxu0 %v1286
  %v2263 = vpop.f32.mrf.mxu0
  %v2264 = vadd.f32 %v288, %v2263
  %v2265 = vpop.f32.mrf.mxu0
  %v2266 = vpop.f32.mrf.mxu0
  %v2267 = vadd.f32 %v288, %v2266
  %v2268 = vpop.f32.mrf.mxu0
  %2269 = vmatprep.mubr.bf16.mxu0 0
  %2270 = vmatmul.mubr.bf16.gmra.mxu0 %v1289
  %v2271 = vpop.f32.mrf.mxu0
  %v2272 = vadd.f32 %v288, %v2271
  %v2273 = vpop.f32.mrf.mxu0
  %v2274 = vpop.f32.mrf.mxu0
  %v2275 = vadd.f32 %v288, %v2274
  %v2276 = vpop.f32.mrf.mxu0
  %2277 = vmatprep.mubr.bf16.mxu0 0
  %2278 = vmatmul.mubr.bf16.gmra.mxu0 %v1292
  %v2279 = vpop.f32.mrf.mxu0
  %v2280 = vadd.f32 %v288, %v2279
  %v2281 = vpop.f32.mrf.mxu0
  %v2282 = vpop.f32.mrf.mxu0
  %v2283 = vadd.f32 %v288, %v2282
  %v2284 = vpop.f32.mrf.mxu0
  %2285 = vmatprep.mubr.bf16.mxu0 0
  %2286 = vmatmul.mubr.bf16.gmra.mxu0 %v1295
  %v2287 = vpop.f32.mrf.mxu0
  %v2288 = vadd.f32 %v288, %v2287
  %v2289 = vpop.f32.mrf.mxu0
  %v2290 = vpop.f32.mrf.mxu0
  %v2291 = vadd.f32 %v288, %v2290
  %v2292 = vpop.f32.mrf.mxu0
  %2293 = vmatprep.mubr.bf16.mxu0 0
  %2294 = vmatmul.mubr.bf16.gmra.mxu0 %v1298
  %v2295 = vpop.f32.mrf.mxu0
  %v2296 = vadd.f32 %v288, %v2295
  %v2297 = vpop.f32.mrf.mxu0
  %v2298 = vpop.f32.mrf.mxu0
  %v2299 = vadd.f32 %v288, %v2298
  %v2300 = vpop.f32.mrf.mxu0
  %2301 = vmatprep.mubr.bf16.mxu0 0
  %2302 = vmatmul.mubr.bf16.gmra.mxu0 %v1301
  %v2303 = vpop.f32.mrf.mxu0
  %v2304 = vadd.f32 %v288, %v2303
  %v2305 = vpop.f32.mrf.mxu0
  %v2306 = vpop.f32.mrf.mxu0
  %v2307 = vadd.f32 %v288, %v2306
  %v2308 = vpop.f32.mrf.mxu0
  %2309 = vmatprep.mubr.bf16.mxu0 0
  %2310 = vmatmul.mubr.bf16.gmra.mxu0 %v1304
  %v2311 = vpop.f32.mrf.mxu0
  %v2312 = vadd.f32 %v288, %v2311
  %v2313 = vpop.f32.mrf.mxu0
  %v2314 = vpop.f32.mrf.mxu0
  %v2315 = vadd.f32 %v288, %v2314
  %v2316 = vpop.f32.mrf.mxu0
  %2317 = vmatprep.mubr.bf16.mxu0 0
  %2318 = vmatmul.mubr.bf16.gmra.mxu0 %v1307
  %v2319 = vpop.f32.mrf.mxu0
  %v2320 = vadd.f32 %v288, %v2319
  %v2321 = vpop.f32.mrf.mxu0
  %v2322 = vpop.f32.mrf.mxu0
  %v2323 = vadd.f32 %v288, %v2322
  %v2324 = vpop.f32.mrf.mxu0
  %2325 = vmatprep.mubr.bf16.mxu0 0
  %2326 = vmatmul.mubr.bf16.gmra.mxu0 %v1310
  %v2327 = vpop.f32.mrf.mxu0
  %v2328 = vadd.f32 %v288, %v2327
  %v2329 = vpop.f32.mrf.mxu0
  %v2330 = vpop.f32.mrf.mxu0
  %v2331 = vadd.f32 %v288, %v2330
  %v2332 = vpop.f32.mrf.mxu0
  %2333 = vmatprep.mubr.bf16.mxu0 0
  %2334 = vmatmul.mubr.bf16.gmra.mxu0 %v1313
  %v2335 = vpop.f32.mrf.mxu0
  %v2336 = vadd.f32 %v288, %v2335
  %v2337 = vpop.f32.mrf.mxu0
  %v2338 = vpop.f32.mrf.mxu0
  %v2339 = vadd.f32 %v288, %v2338
  %v2340 = vpop.f32.mrf.mxu0
  %2341 = vmatprep.mubr.bf16.mxu0 0
  %2342 = vmatmul.mubr.bf16.gmra.mxu0 %v1316
  %v2343 = vpop.f32.mrf.mxu0
  %v2344 = vadd.f32 %v288, %v2343
  %v2345 = vpop.f32.mrf.mxu0
  %v2346 = vpop.f32.mrf.mxu0
  %v2347 = vadd.f32 %v288, %v2346
  %v2348 = vpop.f32.mrf.mxu0
  %2349 = vmatprep.mubr.bf16.mxu0 0
  %2350 = vmatmul.mubr.bf16.gmra.mxu0 %v1319
  %v2351 = vpop.f32.mrf.mxu0
  %v2352 = vadd.f32 %v288, %v2351
  %v2353 = vpop.f32.mrf.mxu0
  %v2354 = vpop.f32.mrf.mxu0
  %v2355 = vadd.f32 %v288, %v2354
  %v2356 = vpop.f32.mrf.mxu0
  %2357 = vmatprep.mubr.bf16.mxu0 0
  %2358 = vmatmul.mubr.bf16.gmra.mxu0 %v1322
  %v2359 = vpop.f32.mrf.mxu0
  %v2360 = vadd.f32 %v288, %v2359
  %v2361 = vpop.f32.mrf.mxu0
  %v2362 = vpop.f32.mrf.mxu0
  %v2363 = vadd.f32 %v288, %v2362
  %v2364 = vpop.f32.mrf.mxu0
  %2365 = vmatprep.mubr.bf16.mxu0 0
  %2366 = vmatmul.mubr.bf16.gmra.mxu0 %v1325
  %v2367 = vpop.f32.mrf.mxu0
  %v2368 = vadd.f32 %v288, %v2367
  %v2369 = vpop.f32.mrf.mxu0
  %v2370 = vpop.f32.mrf.mxu0
  %v2371 = vadd.f32 %v288, %v2370
  %v2372 = vpop.f32.mrf.mxu0
  %2373 = vmatprep.mubr.bf16.mxu0 0
  %2374 = vmatmul.mubr.bf16.gmra.mxu0 %v1328
  %v2375 = vpop.f32.mrf.mxu0
  %v2376 = vadd.f32 %v288, %v2375
  %v2377 = vpop.f32.mrf.mxu0
  %v2378 = vpop.f32.mrf.mxu0
  %v2379 = vadd.f32 %v288, %v2378
  %v2380 = vpop.f32.mrf.mxu0
  %2381 = vmatprep.mubr.bf16.mxu0 0
  %2382 = vmatmul.mubr.bf16.gmra.mxu0 %v1331
  %v2383 = vpop.f32.mrf.mxu0
  %v2384 = vadd.f32 %v288, %v2383
  %v2385 = vpop.f32.mrf.mxu0
  %v2386 = vpop.f32.mrf.mxu0
  %v2387 = vadd.f32 %v288, %v2386
  %v2388 = vpop.f32.mrf.mxu0
  %2389 = vdwg.mxu0
  %v2390 = vmax.f32 %v1368, 0.0
  %v2391 = vmax.f32 %v1371, 0.0
  %v2392 = vmax.f32 %v1376, 0.0
  %v2393 = vmax.f32 %v1379, 0.0
  %v2394 = vmax.f32 %v1384, 0.0
  %v2395 = vmax.f32 %v1387, 0.0
  %v2396 = vmax.f32 %v1392, 0.0
  %v2397 = vmax.f32 %v1395, 0.0
  %v2398 = vmax.f32 %v1400, 0.0
  %v2399 = vmax.f32 %v1403, 0.0
  %v2400 = vmax.f32 %v1408, 0.0
  %v2401 = vmax.f32 %v1411, 0.0
  %v2402 = vmax.f32 %v1416, 0.0
  %v2403 = vmax.f32 %v1419, 0.0
  %v2404 = vmax.f32 %v1424, 0.0
  %v2405 = vmax.f32 %v1427, 0.0
  %v2406 = vmax.f32 %v1432, 0.0
  %v2407 = vmax.f32 %v1435, 0.0
  %v2408 = vmax.f32 %v1440, 0.0
  %v2409 = vmax.f32 %v1443, 0.0
  %v2410 = vmax.f32 %v1448, 0.0
  %v2411 = vmax.f32 %v1451, 0.0
  %v2412 = vmax.f32 %v1456, 0.0
  %v2413 = vmax.f32 %v1459, 0.0
  %v2414 = vmax.f32 %v1464, 0.0
  %v2415 = vmax.f32 %v1467, 0.0
  %v2416 = vmax.f32 %v1472, 0.0
  %v2417 = vmax.f32 %v1475, 0.0
  %v2418 = vmax.f32 %v1480, 0.0
  %v2419 = vmax.f32 %v1483, 0.0
  %v2420 = vmax.f32 %v1488, 0.0
  %v2421 = vmax.f32 %v1491, 0.0
  %v2422 = vmax.f32 %v1496, 0.0
  %v2423 = vmax.f32 %v1499, 0.0
  %v2424 = vmax.f32 %v1504, 0.0
  %v2425 = vmax.f32 %v1507, 0.0
  %v2426 = vmax.f32 %v1512, 0.0
  %v2427 = vmax.f32 %v1515, 0.0
  %v2428 = vmax.f32 %v1520, 0.0
  %v2429 = vmax.f32 %v1523, 0.0
  %v2430 = vmax.f32 %v1528, 0.0
  %v2431 = vmax.f32 %v1531, 0.0
  %v2432 = vmax.f32 %v1536, 0.0
  %v2433 = vmax.f32 %v1539, 0.0
  %v2434 = vmax.f32 %v1544, 0.0
  %v2435 = vmax.f32 %v1547, 0.0
  %v2436 = vmax.f32 %v1552, 0.0
  %v2437 = vmax.f32 %v1555, 0.0
  %v2438 = vmax.f32 %v1560, 0.0
  %v2439 = vmax.f32 %v1563, 0.0
  %v2440 = vmax.f32 %v1568, 0.0
  %v2441 = vmax.f32 %v1571, 0.0
  %v2442 = vmax.f32 %v1576, 0.0
  %v2443 = vmax.f32 %v1579, 0.0
  %v2444 = vmax.f32 %v1584, 0.0
  %v2445 = vmax.f32 %v1587, 0.0
  %v2446 = vmax.f32 %v1592, 0.0
  %v2447 = vmax.f32 %v1595, 0.0
  %v2448 = vmax.f32 %v1600, 0.0
  %v2449 = vmax.f32 %v1603, 0.0
  %v2450 = vmax.f32 %v1608, 0.0
  %v2451 = vmax.f32 %v1611, 0.0
  %v2452 = vmax.f32 %v1616, 0.0
  %v2453 = vmax.f32 %v1619, 0.0
  %v2454 = vmax.f32 %v1624, 0.0
  %v2455 = vmax.f32 %v1627, 0.0
  %v2456 = vmax.f32 %v1632, 0.0
  %v2457 = vmax.f32 %v1635, 0.0
  %v2458 = vmax.f32 %v1640, 0.0
  %v2459 = vmax.f32 %v1643, 0.0
  %v2460 = vmax.f32 %v1648, 0.0
  %v2461 = vmax.f32 %v1651, 0.0
  %v2462 = vmax.f32 %v1656, 0.0
  %v2463 = vmax.f32 %v1659, 0.0
  %v2464 = vmax.f32 %v1664, 0.0
  %v2465 = vmax.f32 %v1667, 0.0
  %v2466 = vmax.f32 %v1672, 0.0
  %v2467 = vmax.f32 %v1675, 0.0
  %v2468 = vmax.f32 %v1680, 0.0
  %v2469 = vmax.f32 %v1683, 0.0
  %v2470 = vmax.f32 %v1688, 0.0
  %v2471 = vmax.f32 %v1691, 0.0
  %v2472 = vmax.f32 %v1696, 0.0
  %v2473 = vmax.f32 %v1699, 0.0
  %v2474 = vmax.f32 %v1704, 0.0
  %v2475 = vmax.f32 %v1707, 0.0
  %v2476 = vmax.f32 %v1712, 0.0
  %v2477 = vmax.f32 %v1715, 0.0
  %v2478 = vmax.f32 %v1720, 0.0
  %v2479 = vmax.f32 %v1723, 0.0
  %v2480 = vmax.f32 %v1728, 0.0
  %v2481 = vmax.f32 %v1731, 0.0
  %v2482 = vmax.f32 %v1736, 0.0
  %v2483 = vmax.f32 %v1739, 0.0
  %v2484 = vmax.f32 %v1744, 0.0
  %v2485 = vmax.f32 %v1747, 0.0
  %v2486 = vmax.f32 %v1752, 0.0
  %v2487 = vmax.f32 %v1755, 0.0
  %v2488 = vmax.f32 %v1760, 0.0
  %v2489 = vmax.f32 %v1763, 0.0
  %v2490 = vmax.f32 %v1768, 0.0
  %v2491 = vmax.f32 %v1771, 0.0
  %v2492 = vmax.f32 %v1776, 0.0
  %v2493 = vmax.f32 %v1779, 0.0
  %v2494 = vmax.f32 %v1784, 0.0
  %v2495 = vmax.f32 %v1787, 0.0
  %v2496 = vmax.f32 %v1792, 0.0
  %v2497 = vmax.f32 %v1795, 0.0
  %v2498 = vmax.f32 %v1800, 0.0
  %v2499 = vmax.f32 %v1803, 0.0
  %v2500 = vmax.f32 %v1808, 0.0
  %v2501 = vmax.f32 %v1811, 0.0
  %v2502 = vmax.f32 %v1816, 0.0
  %v2503 = vmax.f32 %v1819, 0.0
  %v2504 = vmax.f32 %v1824, 0.0
  %v2505 = vmax.f32 %v1827, 0.0
  %v2506 = vmax.f32 %v1832, 0.0
  %v2507 = vmax.f32 %v1835, 0.0
  %v2508 = vmax.f32 %v1840, 0.0
  %v2509 = vmax.f32 %v1843, 0.0
  %v2510 = vmax.f32 %v1848, 0.0
  %v2511 = vmax.f32 %v1851, 0.0
  %v2512 = vmax.f32 %v1856, 0.0
  %v2513 = vmax.f32 %v1859, 0.0
  %v2514 = vmax.f32 %v1864, 0.0
  %v2515 = vmax.f32 %v1867, 0.0
  %v2516 = vmax.f32 %v1872, 0.0
  %v2517 = vmax.f32 %v1875, 0.0
  %v2518 = vmax.f32 %v1880, 0.0
  %v2519 = vmax.f32 %v1883, 0.0
  %v2520 = vmax.f32 %v1888, 0.0
  %v2521 = vmax.f32 %v1891, 0.0
  %v2522 = vmax.f32 %v1896, 0.0
  %v2523 = vmax.f32 %v1899, 0.0
  %v2524 = vmax.f32 %v1904, 0.0
  %v2525 = vmax.f32 %v1907, 0.0
  %v2526 = vmax.f32 %v1912, 0.0
  %v2527 = vmax.f32 %v1915, 0.0
  %v2528 = vmax.f32 %v1920, 0.0
  %v2529 = vmax.f32 %v1923, 0.0
  %v2530 = vmax.f32 %v1928, 0.0
  %v2531 = vmax.f32 %v1931, 0.0
  %v2532 = vmax.f32 %v1936, 0.0
  %v2533 = vmax.f32 %v1939, 0.0
  %v2534 = vmax.f32 %v1944, 0.0
  %v2535 = vmax.f32 %v1947, 0.0
  %v2536 = vmax.f32 %v1952, 0.0
  %v2537 = vmax.f32 %v1955, 0.0
  %v2538 = vmax.f32 %v1960, 0.0
  %v2539 = vmax.f32 %v1963, 0.0
  %v2540 = vmax.f32 %v1968, 0.0
  %v2541 = vmax.f32 %v1971, 0.0
  %v2542 = vmax.f32 %v1976, 0.0
  %v2543 = vmax.f32 %v1979, 0.0
  %v2544 = vmax.f32 %v1984, 0.0
  %v2545 = vmax.f32 %v1987, 0.0
  %v2546 = vmax.f32 %v1992, 0.0
  %v2547 = vmax.f32 %v1995, 0.0
  %v2548 = vmax.f32 %v2000, 0.0
  %v2549 = vmax.f32 %v2003, 0.0
  %v2550 = vmax.f32 %v2008, 0.0
  %v2551 = vmax.f32 %v2011, 0.0
  %v2552 = vmax.f32 %v2016, 0.0
  %v2553 = vmax.f32 %v2019, 0.0
  %v2554 = vmax.f32 %v2024, 0.0
  %v2555 = vmax.f32 %v2027, 0.0
  %v2556 = vmax.f32 %v2032, 0.0
  %v2557 = vmax.f32 %v2035, 0.0
  %v2558 = vmax.f32 %v2040, 0.0
  %v2559 = vmax.f32 %v2043, 0.0
  %v2560 = vmax.f32 %v2048, 0.0
  %v2561 = vmax.f32 %v2051, 0.0
  %v2562 = vmax.f32 %v2056, 0.0
  %v2563 = vmax.f32 %v2059, 0.0
  %v2564 = vmax.f32 %v2064, 0.0
  %v2565 = vmax.f32 %v2067, 0.0
  %v2566 = vmax.f32 %v2072, 0.0
  %v2567 = vmax.f32 %v2075, 0.0
  %v2568 = vmax.f32 %v2080, 0.0
  %v2569 = vmax.f32 %v2083, 0.0
  %v2570 = vmax.f32 %v2088, 0.0
  %v2571 = vmax.f32 %v2091, 0.0
  %v2572 = vmax.f32 %v2096, 0.0
  %v2573 = vmax.f32 %v2099, 0.0
  %v2574 = vmax.f32 %v2104, 0.0
  %v2575 = vmax.f32 %v2107, 0.0
  %v2576 = vmax.f32 %v2112, 0.0
  %v2577 = vmax.f32 %v2115, 0.0
  %v2578 = vmax.f32 %v2120, 0.0
  %v2579 = vmax.f32 %v2123, 0.0
  %v2580 = vmax.f32 %v2128, 0.0
  %v2581 = vmax.f32 %v2131, 0.0
  %v2582 = vmax.f32 %v2136, 0.0
  %v2583 = vmax.f32 %v2139, 0.0
  %v2584 = vmax.f32 %v2144, 0.0
  %v2585 = vmax.f32 %v2147, 0.0
  %v2586 = vmax.f32 %v2152, 0.0
  %v2587 = vmax.f32 %v2155, 0.0
  %v2588 = vmax.f32 %v2160, 0.0
  %v2589 = vmax.f32 %v2163, 0.0
  %v2590 = vmax.f32 %v2168, 0.0
  %v2591 = vmax.f32 %v2171, 0.0
  %v2592 = vmax.f32 %v2176, 0.0
  %v2593 = vmax.f32 %v2179, 0.0
  %v2594 = vmax.f32 %v2184, 0.0
  %v2595 = vmax.f32 %v2187, 0.0
  %v2596 = vmax.f32 %v2192, 0.0
  %v2597 = vmax.f32 %v2195, 0.0
  %v2598 = vmax.f32 %v2200, 0.0
  %v2599 = vmax.f32 %v2203, 0.0
  %v2600 = vmax.f32 %v2208, 0.0
  %v2601 = vmax.f32 %v2211, 0.0
  %v2602 = vmax.f32 %v2216, 0.0
  %v2603 = vmax.f32 %v2219, 0.0
  %v2604 = vmax.f32 %v2224, 0.0
  %v2605 = vmax.f32 %v2227, 0.0
  %v2606 = vmax.f32 %v2232, 0.0
  %v2607 = vmax.f32 %v2235, 0.0
  %v2608 = vmax.f32 %v2240, 0.0
  %v2609 = vmax.f32 %v2243, 0.0
  %v2610 = vmax.f32 %v2248, 0.0
  %v2611 = vmax.f32 %v2251, 0.0
  %v2612 = vmax.f32 %v2256, 0.0
  %v2613 = vmax.f32 %v2259, 0.0
  %v2614 = vmax.f32 %v2264, 0.0
  %v2615 = vmax.f32 %v2267, 0.0
  %v2616 = vmax.f32 %v2272, 0.0
  %v2617 = vmax.f32 %v2275, 0.0
  %v2618 = vmax.f32 %v2280, 0.0
  %v2619 = vmax.f32 %v2283, 0.0
  %v2620 = vmax.f32 %v2288, 0.0
  %v2621 = vmax.f32 %v2291, 0.0
  %v2622 = vmax.f32 %v2296, 0.0
  %v2623 = vmax.f32 %v2299, 0.0
  %v2624 = vmax.f32 %v2304, 0.0
  %v2625 = vmax.f32 %v2307, 0.0
  %v2626 = vmax.f32 %v2312, 0.0
  %v2627 = vmax.f32 %v2315, 0.0
  %v2628 = vmax.f32 %v2320, 0.0
  %v2629 = vmax.f32 %v2323, 0.0
  %v2630 = vmax.f32 %v2328, 0.0
  %v2631 = vmax.f32 %v2331, 0.0
  %v2632 = vmax.f32 %v2336, 0.0
  %v2633 = vmax.f32 %v2339, 0.0
  %v2634 = vmax.f32 %v2344, 0.0
  %v2635 = vmax.f32 %v2347, 0.0
  %v2636 = vmax.f32 %v2352, 0.0
  %v2637 = vmax.f32 %v2355, 0.0
  %v2638 = vmax.f32 %v2360, 0.0
  %v2639 = vmax.f32 %v2363, 0.0
  %v2640 = vmax.f32 %v2368, 0.0
  %v2641 = vmax.f32 %v2371, 0.0
  %v2642 = vmax.f32 %v2376, 0.0
  %v2643 = vmax.f32 %v2379, 0.0
  %v2644 = vmax.f32 %v2384, 0.0
  %v2645 = vmax.f32 %v2387, 0.0
  %v2646 = vadd.f32 %v2390, %v2391
  %v2647 = vadd.f32 %v2646, %v2392
  %v2648 = vadd.f32 %v2647, %v2393
  %v2649 = vadd.f32 %v2648, %v2394
  %v2650 = vadd.f32 %v2649, %v2395
  %v2651 = vadd.f32 %v2650, %v2396
  %v2652 = vadd.f32 %v2651, %v2397
  %v2653 = vadd.f32 %v2652, %v2398
  %v2654 = vadd.f32 %v2653, %v2399
  %v2655 = vadd.f32 %v2654, %v2400
  %v2656 = vadd.f32 %v2655, %v2401
  %v2657 = vadd.f32 %v2656, %v2402
  %v2658 = vadd.f32 %v2657, %v2403
  %v2659 = vadd.f32 %v2658, %v2404
  %v2660 = vadd.f32 %v2659, %v2405
  %v2661 = vadd.f32 %v2660, %v2406
  %v2662 = vadd.f32 %v2661, %v2407
  %v2663 = vadd.f32 %v2662, %v2408
  %v2664 = vadd.f32 %v2663, %v2409
  %v2665 = vadd.f32 %v2664, %v2410
  %v2666 = vadd.f32 %v2665, %v2411
  %v2667 = vadd.f32 %v2666, %v2412
  %v2668 = vadd.f32 %v2667, %v2413
  %v2669 = vadd.f32 %v2668, %v2414
  %v2670 = vadd.f32 %v2669, %v2415
  %v2671 = vadd.f32 %v2670, %v2416
  %v2672 = vadd.f32 %v2671, %v2417
  %v2673 = vadd.f32 %v2672, %v2418
  %v2674 = vadd.f32 %v2673, %v2419
  %v2675 = vadd.f32 %v2674, %v2420
  %v2676 = vadd.f32 %v2675, %v2421
  %v2677 = vrot.slane %v2676, 4
  %v2678 = vadd.f32 %v2676, %v2677
  %v2679 = vrot.slane %v2678, 2
  %v2680 = vadd.f32 %v2678, %v2679
  %v2681 = vrot.slane %v2680, 1
  %v2682 = vadd.f32 %v2680, %v2681
  %v2683 = vadd.f32 %v2422, %v2423
  %v2684 = vadd.f32 %v2683, %v2424
  %v2685 = vadd.f32 %v2684, %v2425
  %v2686 = vadd.f32 %v2685, %v2426
  %v2687 = vadd.f32 %v2686, %v2427
  %v2688 = vadd.f32 %v2687, %v2428
  %v2689 = vadd.f32 %v2688, %v2429
  %v2690 = vadd.f32 %v2689, %v2430
  %v2691 = vadd.f32 %v2690, %v2431
  %v2692 = vadd.f32 %v2691, %v2432
  %v2693 = vadd.f32 %v2692, %v2433
  %v2694 = vadd.f32 %v2693, %v2434
  %v2695 = vadd.f32 %v2694, %v2435
  %v2696 = vadd.f32 %v2695, %v2436
  %v2697 = vadd.f32 %v2696, %v2437
  %v2698 = vadd.f32 %v2697, %v2438
  %v2699 = vadd.f32 %v2698, %v2439
  %v2700 = vadd.f32 %v2699, %v2440
  %v2701 = vadd.f32 %v2700, %v2441
  %v2702 = vadd.f32 %v2701, %v2442
  %v2703 = vadd.f32 %v2702, %v2443
  %v2704 = vadd.f32 %v2703, %v2444
  %v2705 = vadd.f32 %v2704, %v2445
  %v2706 = vadd.f32 %v2705, %v2446
  %v2707 = vadd.f32 %v2706, %v2447
  %v2708 = vadd.f32 %v2707, %v2448
  %v2709 = vadd.f32 %v2708, %v2449
  %v2710 = vadd.f32 %v2709, %v2450
  %v2711 = vadd.f32 %v2710, %v2451
  %v2712 = vadd.f32 %v2711, %v2452
  %v2713 = vadd.f32 %v2712, %v2453
  %v2714 = vrot.slane %v2713, 4
  %v2715 = vadd.f32 %v2713, %v2714
  %v2716 = vrot.slane %v2715, 2
  %v2717 = vadd.f32 %v2715, %v2716
  %v2718 = vrot.slane %v2717, 1
  %v2719 = vadd.f32 %v2717, %v2718
  %v2720 = vadd.f32 %v2454, %v2455
  %v2721 = vadd.f32 %v2720, %v2456
  %v2722 = vadd.f32 %v2721, %v2457
  %v2723 = vadd.f32 %v2722, %v2458
  %v2724 = vadd.f32 %v2723, %v2459
  %v2725 = vadd.f32 %v2724, %v2460
  %v2726 = vadd.f32 %v2725, %v2461
  %v2727 = vadd.f32 %v2726, %v2462
  %v2728 = vadd.f32 %v2727, %v2463
  %v2729 = vadd.f32 %v2728, %v2464
  %v2730 = vadd.f32 %v2729, %v2465
  %v2731 = vadd.f32 %v2730, %v2466
  %v2732 = vadd.f32 %v2731, %v2467
  %v2733 = vadd.f32 %v2732, %v2468
  %v2734 = vadd.f32 %v2733, %v2469
  %v2735 = vadd.f32 %v2734, %v2470
  %v2736 = vadd.f32 %v2735, %v2471
  %v2737 = vadd.f32 %v2736, %v2472
  %v2738 = vadd.f32 %v2737, %v2473
  %v2739 = vadd.f32 %v2738, %v2474
  %v2740 = vadd.f32 %v2739, %v2475
  %v2741 = vadd.f32 %v2740, %v2476
  %v2742 = vadd.f32 %v2741, %v2477
  %v2743 = vadd.f32 %v2742, %v2478
  %v2744 = vadd.f32 %v2743, %v2479
  %v2745 = vadd.f32 %v2744, %v2480
  %v2746 = vadd.f32 %v2745, %v2481
  %v2747 = vadd.f32 %v2746, %v2482
  %v2748 = vadd.f32 %v2747, %v2483
  %v2749 = vadd.f32 %v2748, %v2484
  %v2750 = vadd.f32 %v2749, %v2485
  %v2751 = vrot.slane %v2750, 4
  %v2752 = vadd.f32 %v2750, %v2751
  %v2753 = vrot.slane %v2752, 2
  %v2754 = vadd.f32 %v2752, %v2753
  %v2755 = vrot.slane %v2754, 1
  %v2756 = vadd.f32 %v2754, %v2755
  %v2757 = vadd.f32 %v2486, %v2487
  %v2758 = vadd.f32 %v2757, %v2488
  %v2759 = vadd.f32 %v2758, %v2489
  %v2760 = vadd.f32 %v2759, %v2490
  %v2761 = vadd.f32 %v2760, %v2491
  %v2762 = vadd.f32 %v2761, %v2492
  %v2763 = vadd.f32 %v2762, %v2493
  %v2764 = vadd.f32 %v2763, %v2494
  %v2765 = vadd.f32 %v2764, %v2495
  %v2766 = vadd.f32 %v2765, %v2496
  %v2767 = vadd.f32 %v2766, %v2497
  %v2768 = vadd.f32 %v2767, %v2498
  %v2769 = vadd.f32 %v2768, %v2499
  %v2770 = vadd.f32 %v2769, %v2500
  %v2771 = vadd.f32 %v2770, %v2501
  %v2772 = vadd.f32 %v2771, %v2502
  %v2773 = vadd.f32 %v2772, %v2503
  %v2774 = vadd.f32 %v2773, %v2504
  %v2775 = vadd.f32 %v2774, %v2505
  %v2776 = vadd.f32 %v2775, %v2506
  %v2777 = vadd.f32 %v2776, %v2507
  %v2778 = vadd.f32 %v2777, %v2508
  %v2779 = vadd.f32 %v2778, %v2509
  %v2780 = vadd.f32 %v2779, %v2510
  %v2781 = vadd.f32 %v2780, %v2511
  %v2782 = vadd.f32 %v2781, %v2512
  %v2783 = vadd.f32 %v2782, %v2513
  %v2784 = vadd.f32 %v2783, %v2514
  %v2785 = vadd.f32 %v2784, %v2515
  %v2786 = vadd.f32 %v2785, %v2516
  %v2787 = vadd.f32 %v2786, %v2517
  %v2788 = vrot.slane %v2787, 4
  %v2789 = vadd.f32 %v2787, %v2788
  %v2790 = vrot.slane %v2789, 2
  %v2791 = vadd.f32 %v2789, %v2790
  %v2792 = vrot.slane %v2791, 1
  %v2793 = vadd.f32 %v2791, %v2792
  %v2794 = vadd.f32 %v2518, %v2519
  %v2795 = vadd.f32 %v2794, %v2520
  %v2796 = vadd.f32 %v2795, %v2521
  %v2797 = vadd.f32 %v2796, %v2522
  %v2798 = vadd.f32 %v2797, %v2523
  %v2799 = vadd.f32 %v2798, %v2524
  %v2800 = vadd.f32 %v2799, %v2525
  %v2801 = vadd.f32 %v2800, %v2526
  %v2802 = vadd.f32 %v2801, %v2527
  %v2803 = vadd.f32 %v2802, %v2528
  %v2804 = vadd.f32 %v2803, %v2529
  %v2805 = vadd.f32 %v2804, %v2530
  %v2806 = vadd.f32 %v2805, %v2531
  %v2807 = vadd.f32 %v2806, %v2532
  %v2808 = vadd.f32 %v2807, %v2533
  %v2809 = vadd.f32 %v2808, %v2534
  %v2810 = vadd.f32 %v2809, %v2535
  %v2811 = vadd.f32 %v2810, %v2536
  %v2812 = vadd.f32 %v2811, %v2537
  %v2813 = vadd.f32 %v2812, %v2538
  %v2814 = vadd.f32 %v2813, %v2539
  %v2815 = vadd.f32 %v2814, %v2540
  %v2816 = vadd.f32 %v2815, %v2541
  %v2817 = vadd.f32 %v2816, %v2542
  %v2818 = vadd.f32 %v2817, %v2543
  %v2819 = vadd.f32 %v2818, %v2544
  %v2820 = vadd.f32 %v2819, %v2545
  %v2821 = vadd.f32 %v2820, %v2546
  %v2822 = vadd.f32 %v2821, %v2547
  %v2823 = vadd.f32 %v2822, %v2548
  %v2824 = vadd.f32 %v2823, %v2549
  %v2825 = vrot.slane %v2824, 4
  %v2826 = vadd.f32 %v2824, %v2825
  %v2827 = vrot.slane %v2826, 2
  %v2828 = vadd.f32 %v2826, %v2827
  %v2829 = vrot.slane %v2828, 1
  %v2830 = vadd.f32 %v2828, %v2829
  %v2831 = vadd.f32 %v2550, %v2551
  %v2832 = vadd.f32 %v2831, %v2552
  %v2833 = vadd.f32 %v2832, %v2553
  %v2834 = vadd.f32 %v2833, %v2554
  %v2835 = vadd.f32 %v2834, %v2555
  %v2836 = vadd.f32 %v2835, %v2556
  %v2837 = vadd.f32 %v2836, %v2557
  %v2838 = vadd.f32 %v2837, %v2558
  %v2839 = vadd.f32 %v2838, %v2559
  %v2840 = vadd.f32 %v2839, %v2560
  %v2841 = vadd.f32 %v2840, %v2561
  %v2842 = vadd.f32 %v2841, %v2562
  %v2843 = vadd.f32 %v2842, %v2563
  %v2844 = vadd.f32 %v2843, %v2564
  %v2845 = vadd.f32 %v2844, %v2565
  %v2846 = vadd.f32 %v2845, %v2566
  %v2847 = vadd.f32 %v2846, %v2567
  %v2848 = vadd.f32 %v2847, %v2568
  %v2849 = vadd.f32 %v2848, %v2569
  %v2850 = vadd.f32 %v2849, %v2570
  %v2851 = vadd.f32 %v2850, %v2571
  %v2852 = vadd.f32 %v2851, %v2572
  %v2853 = vadd.f32 %v2852, %v2573
  %v2854 = vadd.f32 %v2853, %v2574
  %v2855 = vadd.f32 %v2854, %v2575
  %v2856 = vadd.f32 %v2855, %v2576
  %v2857 = vadd.f32 %v2856, %v2577
  %v2858 = vadd.f32 %v2857, %v2578
  %v2859 = vadd.f32 %v2858, %v2579
  %v2860 = vadd.f32 %v2859, %v2580
  %v2861 = vadd.f32 %v2860, %v2581
  %v2862 = vrot.slane %v2861, 4
  %v2863 = vadd.f32 %v2861, %v2862
  %v2864 = vrot.slane %v2863, 2
  %v2865 = vadd.f32 %v2863, %v2864
  %v2866 = vrot.slane %v2865, 1
  %v2867 = vadd.f32 %v2865, %v2866
  %v2868 = vadd.f32 %v2582, %v2583
  %v2869 = vadd.f32 %v2868, %v2584
  %v2870 = vadd.f32 %v2869, %v2585
  %v2871 = vadd.f32 %v2870, %v2586
  %v2872 = vadd.f32 %v2871, %v2587
  %v2873 = vadd.f32 %v2872, %v2588
  %v2874 = vadd.f32 %v2873, %v2589
  %v2875 = vadd.f32 %v2874, %v2590
  %v2876 = vadd.f32 %v2875, %v2591
  %v2877 = vadd.f32 %v2876, %v2592
  %v2878 = vadd.f32 %v2877, %v2593
  %v2879 = vadd.f32 %v2878, %v2594
  %v2880 = vadd.f32 %v2879, %v2595
  %v2881 = vadd.f32 %v2880, %v2596
  %v2882 = vadd.f32 %v2881, %v2597
  %v2883 = vadd.f32 %v2882, %v2598
  %v2884 = vadd.f32 %v2883, %v2599
  %v2885 = vadd.f32 %v2884, %v2600
  %v2886 = vadd.f32 %v2885, %v2601
  %v2887 = vadd.f32 %v2886, %v2602
  %v2888 = vadd.f32 %v2887, %v2603
  %v2889 = vadd.f32 %v2888, %v2604
  %v2890 = vadd.f32 %v2889, %v2605
  %v2891 = vadd.f32 %v2890, %v2606
  %v2892 = vadd.f32 %v2891, %v2607
  %v2893 = vadd.f32 %v2892, %v2608
  %v2894 = vadd.f32 %v2893, %v2609
  %v2895 = vadd.f32 %v2894, %v2610
  %v2896 = vadd.f32 %v2895, %v2611
  %v2897 = vadd.f32 %v2896, %v2612
  %v2898 = vadd.f32 %v2897, %v2613
  %v2899 = vrot.slane %v2898, 4
  %v2900 = vadd.f32 %v2898, %v2899
  %v2901 = vrot.slane %v2900, 2
  %v2902 = vadd.f32 %v2900, %v2901
  %v2903 = vrot.slane %v2902, 1
  %v2904 = vadd.f32 %v2902, %v2903
  %v2905 = vadd.f32 %v2614, %v2615
  %v2906 = vadd.f32 %v2905, %v2616
  %v2907 = vadd.f32 %v2906, %v2617
  %v2908 = vadd.f32 %v2907, %v2618
  %v2909 = vadd.f32 %v2908, %v2619
  %v2910 = vadd.f32 %v2909, %v2620
  %v2911 = vadd.f32 %v2910, %v2621
  %v2912 = vadd.f32 %v2911, %v2622
  %v2913 = vadd.f32 %v2912, %v2623
  %v2914 = vadd.f32 %v2913, %v2624
  %v2915 = vadd.f32 %v2914, %v2625
  %v2916 = vadd.f32 %v2915, %v2626
  %v2917 = vadd.f32 %v2916, %v2627
  %v2918 = vadd.f32 %v2917, %v2628
  %v2919 = vadd.f32 %v2918, %v2629
  %v2920 = vadd.f32 %v2919, %v2630
  %v2921 = vadd.f32 %v2920, %v2631
  %v2922 = vadd.f32 %v2921, %v2632
  %v2923 = vadd.f32 %v2922, %v2633
  %v2924 = vadd.f32 %v2923, %v2634
  %v2925 = vadd.f32 %v2924, %v2635
  %v2926 = vadd.f32 %v2925, %v2636
  %v2927 = vadd.f32 %v2926, %v2637
  %v2928 = vadd.f32 %v2927, %v2638
  %v2929 = vadd.f32 %v2928, %v2639
  %v2930 = vadd.f32 %v2929, %v2640
  %v2931 = vadd.f32 %v2930, %v2641
  %v2932 = vadd.f32 %v2931, %v2642
  %v2933 = vadd.f32 %v2932, %v2643
  %v2934 = vadd.f32 %v2933, %v2644
  %v2935 = vadd.f32 %v2934, %v2645
  %v2936 = vrot.slane %v2935, 4
  %v2937 = vadd.f32 %v2935, %v2936
  %v2938 = vrot.slane %v2937, 2
  %v2939 = vadd.f32 %v2937, %v2938
  %v2940 = vrot.slane %v2939, 1
  %v2941 = vadd.f32 %v2939, %v2940
  %v2942 = vmul.f32 %v2682, 0.00390625
  %v2943 = vmul.f32 %v2719, 0.00390625
  %v2944 = vmul.f32 %v2756, 0.00390625
  %v2945 = vmul.f32 %v2793, 0.00390625
  %v2946 = vmul.f32 %v2830, 0.00390625
  %v2947 = vmul.f32 %v2867, 0.00390625
  %v2948 = vmul.f32 %v2904, 0.00390625
  %v2949 = vmul.f32 %v2941, 0.00390625
  %v2950 = vpack.c.bf16 %v2942, %v2942
  %v2951 = vpack.c.bf16 %v2943, %v2943
  %v2952 = vpack.c.bf16 %v2944, %v2944
  %v2953 = vpack.c.bf16 %v2945, %v2945
  %v2954 = vpack.c.bf16 %v2946, %v2946
  %v2955 = vpack.c.bf16 %v2947, %v2947
  %v2956 = vpack.c.bf16 %v2948, %v2948
  %v2957 = vpack.c.bf16 %v2949, %v2949
  %v2958 = vld [vmem:[%s3] sm:$0xf]
  %v2959 = vld [vmem:[%s3 + $0x4] sm:$0xf]
  %v2960 = vld [vmem:[%s3 + $0x8] sm:$0xf]
  %v2961 = vld [vmem:[%s3 + $0xc] sm:$0xf]
  %v2962 = vld [vmem:[%s3 + $0x10] sm:$0xf]
  %v2963 = vld [vmem:[%s3 + $0x14] sm:$0xf]
  %v2964 = vld [vmem:[%s3 + $0x18] sm:$0xf]
  %v2965 = vld [vmem:[%s3 + $0x1c] sm:$0xf]
  %v2966 = vld [vmem:[%s3 + $0x20] sm:$0xf]
  %v2967 = vld [vmem:[%s3 + $0x24] sm:$0xf]
  %v2968 = vld [vmem:[%s3 + $0x28] sm:$0xf]
  %v2969 = vld [vmem:[%s3 + $0x2c] sm:$0xf]
  %v2970 = vld [vmem:[%s3 + $0x30] sm:$0xf]
  %v2971 = vld [vmem:[%s3 + $0x34] sm:$0xf]
  %v2972 = vld [vmem:[%s3 + $0x38] sm:$0xf]
  %v2973 = vld [vmem:[%s3 + $0x3c] sm:$0xf]
  %v2974 = vld [vmem:[%s4] sm:$0x1]
  %v2976 = vlaneseq
  %v2977 = vshrl.u32 %v2976, 7
  %v2978 = vsub.s32 0, %v2977
  %v2979 = vrot.slane %v2974, %v2978
  %v2989 = vunpack.c.l.b16 %v2950
  %v2990 = vunpack.c.l.b16 %v2951
  %v2991 = vunpack.c.l.b16 %v2952
  %v2992 = vunpack.c.l.b16 %v2953
  %v2993 = vunpack.c.l.b16 %v2954
  %v2994 = vunpack.c.l.b16 %v2955
  %v2995 = vunpack.c.l.b16 %v2956
  %v2996 = vunpack.c.l.b16 %v2957
  %vm2997 = vcmask 1041409
  %v2998 = vsel %vm2997, %v2990, %v2989
  %vm2999 = vcmask 1042434
  %v3000 = vsel %vm2999, %v2991, %v2998
  %vm3001 = vcmask 1043459
  %v3002 = vsel %vm3001, %v2992, %v3000
  %vm3003 = vcmask 1044484
  %v3004 = vsel %vm3003, %v2993, %v3002
  %vm3005 = vcmask 1045509
  %v3006 = vsel %vm3005, %v2994, %v3004
  %vm3007 = vcmask 1046534
  %v3008 = vsel %vm3007, %v2995, %v3006
  %vm3009 = vcmask 1047559
  %v3010 = vsel %vm3009, %v2996, %v3008
  %v3011 = vpack.c.b16 %v3010, %v3010
  %v3029 = vunpack.c.l.b16 %v2958
  %v3030 = vunpack.c.l.b16 %v2959
  %v3031 = vunpack.c.l.b16 %v2960
  %v3032 = vunpack.c.l.b16 %v2961
  %v3033 = vunpack.c.l.b16 %v2962
  %v3034 = vunpack.c.l.b16 %v2963
  %v3035 = vunpack.c.l.b16 %v2964
  %v3036 = vunpack.c.l.b16 %v2965
  %v3037 = vunpack.c.l.b16 %v2966
  %v3038 = vunpack.c.l.b16 %v2967
  %v3039 = vunpack.c.l.b16 %v2968
  %v3040 = vunpack.c.l.b16 %v2969
  %v3041 = vunpack.c.l.b16 %v2970
  %v3042 = vunpack.c.l.b16 %v2971
  %v3043 = vunpack.c.l.b16 %v2972
  %v3044 = vunpack.c.l.b16 %v2973
  %v3045 = vpack.c.b16 %v3030, %v3029
  %v3046 = vpack.c.b16 %v3032, %v3031
  %v3047 = vpack.c.b16 %v3034, %v3033
  %v3048 = vpack.c.b16 %v3036, %v3035
  %v3049 = vpack.c.b16 %v3038, %v3037
  %v3050 = vpack.c.b16 %v3040, %v3039
  %v3051 = vpack.c.b16 %v3042, %v3041
  %v3052 = vpack.c.b16 %v3044, %v3043
  %3061 = vmatprep.subr.bf16.mxu0 0
  %3062 = vmatpush1.bf16.msra.mxu0 %v3052
  %3063 = vmatprep.subr.bf16.mxu0 0
  %3064 = vmatpush1.bf16.msra.mxu0 %v3051
  %3065 = vmatprep.subr.bf16.mxu0 0
  %3066 = vmatpush1.bf16.msra.mxu0 %v3050
  %3067 = vmatprep.subr.bf16.mxu0 0
  %3068 = vmatpush1.bf16.msra.mxu0 %v3049
  %3069 = vmatprep.subr.bf16.mxu0 0
  %3070 = vmatpush1.bf16.msra.mxu0 %v3048
  %3071 = vmatprep.subr.bf16.mxu0 0
  %3072 = vmatpush1.bf16.msra.mxu0 %v3047
  %3073 = vmatprep.subr.bf16.mxu0 0
  %3074 = vmatpush1.bf16.msra.mxu0 %v3046
  %3075 = vmatprep.subr.bf16.mxu0 0
  %3076 = vmatpush1.bf16.msra.mxu0 %v3045
  %3077 = vmatprep.subr.bf16.mxu0 0
  %3078 = vmatpush2.bf16.msra.mxu0 0
  %3079 = vmatprep.subr.bf16.mxu0 0
  %3080 = vmatpush2.bf16.msra.mxu0 0
  %3081 = vmatprep.subr.bf16.mxu0 0
  %3082 = vmatpush2.bf16.msra.mxu0 0
  %3083 = vmatprep.subr.bf16.mxu0 0
  %3084 = vmatpush2.bf16.msra.mxu0 0
  %3085 = vmatprep.subr.bf16.mxu0 0
  %3086 = vmatpush2.bf16.msra.mxu0 0
  %3087 = vmatprep.subr.bf16.mxu0 0
  %3088 = vmatpush2.bf16.msra.mxu0 0
  %3089 = vmatprep.subr.bf16.mxu0 0
  %3090 = vmatpush2.bf16.msra.mxu0 0
  %3091 = vmatprep.subr.bf16.mxu0 0
  %3092 = vmatpush2.bf16.msra.mxu0 0
  %3093 = vmatprep.mubr.bf16.mxu0 0
  %3094 = vmatmul.mubr.bf16.gmra.mxu0 %v3011
  %v3095 = vpop.f32.mrf.mxu0
  %v3096 = vadd.f32 %v2979, %v3095
  %v3097 = vpop.f32.mrf.mxu0
  %v3098 = vpop.f32.mrf.mxu0
  %v3099 = vpop.f32.mrf.mxu0
  %3100 = vdwg.mxu0
  %3101 = vst [vmem:[%s5] sm:$0xff] %v3096
  // Predicated region
  $region22: #{flat_classify_forward.1} parent=0 // pred_check
    _
  $region23: #{flat_classify_forward.1} parent=0 // pred_check_branch
    %3103 = sbr.rel (0) target = $region25
  $region24: #{flat_classify_forward.1} parent=0 // pred_region
    _
  $region25: #{flat_classify_forward.1} parent=0 // pred_fallthru
    _
  // Predicated region
  $region26: #{flat_classify_forward.1} parent=0 // pred_check
    _
  $region27: #{flat_classify_forward.1} parent=0 // pred_check_branch
    %3105 = sbr.rel (0) target = $region29
  $region28: #{flat_classify_forward.1} parent=0 // pred_region
    _
  $region29: #{flat_classify_forward.1} parent=0 // pred_fallthru
    _

</llo_original>
